<compile_context>
chip_gen: v5e
topology: v5e:2x2
jax: 0.10.0
libtpu: 0.0.40
codegen_flags: <defaults>
</compile_context>

<pallas_src>
import functools

import jax
import jax.numpy as jnp
from jax import lax
from jax.experimental import pallas as pl
from jax.experimental.pallas import tpu as pltpu

LN_EPS = 1e-5     # nn.LayerNorm default
BN_EPS = 1e-5     # nn.BatchNorm1d default
L2_EPS = 1e-12    # F.normalize default

_LANE = 128
_SUBLANE = 8
_VMEM_BUDGET = 20 * 1024 * 1024   # conservative across v5e/v6e/v7x scoped VMEM
_VMEM_LIMIT = 32 * 1024 * 1024    # explicit limit (< v7x 64 MiB physical)


def _round_up(x, m):
    return (x + m - 1) // m * m


# --------------------------------------------------------------------------
# Stage 1: LayerNorm -> Linear1 (+bias), plus per-tile BatchNorm partial stats
# --------------------------------------------------------------------------
def _stage1_kernel(x_ref, lng_ref, lnb_ref, w1_ref, b1_ref,
                   h_ref, stats_ref, *, d_true, b_true, mask_cols, mask_rows):
    x = x_ref[...].astype(jnp.float32)                      # [TB, Dp]
    tb, d_pad = x.shape

    # ---- LayerNorm over the (true) feature dim; padded columns are zero ----
    inv_d = 1.0 / d_true
    mu = jnp.sum(x, axis=-1, keepdims=True) * inv_d
    if mask_cols:
        cmask = lax.broadcasted_iota(jnp.int32, (1, d_pad), 1) < d_true
        diff = jnp.where(cmask, x - mu, 0.0)
    else:
        diff = x - mu
    var = jnp.sum(diff * diff, axis=-1, keepdims=True) * inv_d
    xn = diff * lax.rsqrt(var + LN_EPS)
    xn = xn * lng_ref[...] + lnb_ref[...]                   # padded g/b are 0

    # ---- Linear 1 (D -> H): bf16 MXU operands, f32 accumulation ----
    h = jnp.dot(xn.astype(jnp.bfloat16), w1_ref[...],
                preferred_element_type=jnp.float32) + b1_ref[...]
    h_ref[...] = h

    # ---- partial BatchNorm statistics (mask out padded batch rows) ----
    if mask_rows:
        row0 = pl.program_id(0) * tb
        rmask = (lax.broadcasted_iota(jnp.int32, (tb, 1), 0) + row0) < b_true
        hm = jnp.where(rmask, h, 0.0)
    else:
        hm = h
    ssum = jnp.sum(hm, axis=0, keepdims=True)               # [1, Hp]
    ssq = jnp.sum(hm * hm, axis=0, keepdims=True)           # [1, Hp]
    stats_ref[...] = jnp.concatenate([ssum, ssq], axis=0)[None]   # [1, 2, Hp]


# --------------------------------------------------------------------------
# Stage 2: folded BN scale/shift -> ReLU -> Linear2 (+bias) -> L2 normalize
# --------------------------------------------------------------------------
def _stage2_kernel(h_ref, s_ref, t_ref, w2_ref, b2_ref, o_ref):
    h = h_ref[...]                                          # [TB, Hp] f32
    hn = jnp.maximum(h * s_ref[...] + t_ref[...], 0.0)      # BN+affine folded

    y = jnp.dot(hn.astype(jnp.bfloat16), w2_ref[...],
                preferred_element_type=jnp.float32) + b2_ref[...]

    # F.normalize(dim=1) via rsqrt of clamped sum-of-squares (EUP path).
    ss = jnp.sum(y * y, axis=-1, keepdims=True)
    inv = lax.rsqrt(jnp.maximum(ss, L2_EPS * L2_EPS))
    o_ref[...] = (y * inv).astype(o_ref.dtype)


def _pick_batch_tile(b, d_pad, h_pad, o_pad, cap=128):
    """Largest multiple-of-8 batch tile (<= cap) fitting the VMEM budget."""
    tb = min(cap, _round_up(b, _SUBLANE))
    resident = (d_pad * h_pad + h_pad * o_pad) * 2 \
        + (2 * d_pad + 4 * h_pad + o_pad) * 4
    while tb > _SUBLANE:
        act = 2 * 4 * tb * (d_pad + 2 * h_pad + o_pad)   # double-buffered f32
        if resident + act <= _VMEM_BUDGET:
            break
        tb = max(_SUBLANE, _round_up(tb // 2, _SUBLANE))
    return tb


def projection_head(x, params):
    """x: [B, D] float32.  params: dict of weights (see init_params)."""
    B, D = x.shape
    H = params["w1"].shape[1]
    O = params["w2"].shape[1]

    Dp = _round_up(D, _LANE)
    Hp = _round_up(H, _LANE)
    Op = _round_up(O, _LANE)
    TB = _pick_batch_tile(B, Dp, Hp, Op)
    Bp = _round_up(B, TB)
    n_tiles = Bp // TB

    f32, bf16 = jnp.float32, jnp.bfloat16

    def pad2(a, rows, cols, dtype):
        a = a.astype(dtype)
        return jnp.pad(a, ((0, rows - a.shape[0]), (0, cols - a.shape[1])))

    xp = pad2(x, Bp, Dp, f32)
    lng = pad2(params["ln_g"].reshape(1, D), 1, Dp, f32)
    lnb = pad2(params["ln_b"].reshape(1, D), 1, Dp, f32)
    w1 = pad2(params["w1"], Dp, Hp, bf16)
    b1 = pad2(params["b1"].reshape(1, H), 1, Hp, f32)
    bng = pad2(params["bn_g"].reshape(1, H), 1, Hp, f32)
    bnb = pad2(params["bn_b"].reshape(1, H), 1, Hp, f32)
    w2 = pad2(params["w2"], Hp, Op, bf16)
    b2 = pad2(params["b2"].reshape(1, O), 1, Op, f32)

    cparams = pltpu.CompilerParams(
        dimension_semantics=("parallel",),
        vmem_limit_bytes=_VMEM_LIMIT)

    resident = lambda i: (0, 0)     # weights / affines stay VMEM-resident
    tiled = lambda i: (i, 0)        # batch-tiled activations

    # ---- stage 1 ----
    stage1 = pl.pallas_call(
        functools.partial(_stage1_kernel, d_true=D, b_true=B,
                          mask_cols=(Dp != D), mask_rows=(Bp != B)),
        grid_spec=pltpu.PrefetchScalarGridSpec(
            num_scalar_prefetch=0,
            grid=(n_tiles,),
            in_specs=[
                pl.BlockSpec((TB, Dp), tiled),        # x
                pl.BlockSpec((1, Dp), resident),      # ln_g
                pl.BlockSpec((1, Dp), resident),      # ln_b
                pl.BlockSpec((Dp, Hp), resident),     # w1 (bf16)
                pl.BlockSpec((1, Hp), resident),      # b1
            ],
            out_specs=[
                pl.BlockSpec((TB, Hp), tiled),                  # h
                pl.BlockSpec((1, 2, Hp), lambda i: (i, 0, 0)),  # partial stats
            ],
        ),
        out_shape=(jax.ShapeDtypeStruct((Bp, Hp), f32),
                   jax.ShapeDtypeStruct((n_tiles, 2, Hp), f32)),
        compiler_params=cparams,
        cost_estimate=pl.CostEstimate(
            flops=2 * Bp * Dp * Hp + 10 * Bp * Dp + 4 * Bp * Hp,
            transcendentals=Bp,
            bytes_accessed=4 * (Bp * Dp + Bp * Hp + n_tiles * 2 * Hp)
            + 2 * Dp * Hp + 4 * (2 * Dp + Hp)),
    )
    h, stats = stage1(xp, lng, lnb, w1, b1)

    # ---- full-batch BN stats + affine folded into a single scale/shift ----
    tot = jnp.sum(stats, axis=0)                     # [2, Hp]
    bm = tot[0] / B                                  # batch mean (b1 included)
    bv = jnp.maximum(tot[1] / B - bm * bm, 0.0)      # biased batch variance
    s = bng[0] * lax.rsqrt(bv + BN_EPS)
    t = bnb[0] - bm * s
    s = s.reshape(1, Hp)
    t = t.reshape(1, Hp)

    # ---- stage 2 ----
    stage2 = pl.pallas_call(
        _stage2_kernel,
        grid_spec=pltpu.PrefetchScalarGridSpec(
            num_scalar_prefetch=0,
            grid=(n_tiles,),
            in_specs=[
                pl.BlockSpec((TB, Hp), tiled),        # h
                pl.BlockSpec((1, Hp), resident),      # scale
                pl.BlockSpec((1, Hp), resident),      # shift
                pl.BlockSpec((Hp, Op), resident),     # w2 (bf16)
                pl.BlockSpec((1, Op), resident),      # b2
            ],
            out_specs=pl.BlockSpec((TB, Op), tiled),
        ),
        out_shape=jax.ShapeDtypeStruct((Bp, Op), f32),
        compiler_params=cparams,
        cost_estimate=pl.CostEstimate(
            flops=2 * Bp * Hp * Op + 6 * Bp * Hp + 4 * Bp * Op,
            transcendentals=Bp,
            bytes_accessed=4 * (Bp * Hp + Bp * Op) + 2 * Hp * Op
            + 4 * (2 * Hp + Op)),
    )
    out = stage2(h, s, t, w2, b2)
    return out[:B, :O].astype(x.dtype)


def init_params(key, input_dim, hidden_dim, output_dim):
    """Deterministic synthetic parameters (PyTorch default-style init)."""
    k1, k2, k3, k4 = jax.random.split(key, 4)
    bound1 = 1.0 / jnp.sqrt(input_dim)
    bound2 = 1.0 / jnp.sqrt(hidden_dim)
    return {
        "ln_g": jnp.ones((1, input_dim), jnp.float32),
        "ln_b": jnp.zeros((1, input_dim), jnp.float32),
        "w1": jax.random.uniform(k1, (input_dim, hidden_dim), jnp.float32,
                                 -bound1, bound1),
        "b1": jax.random.uniform(k2, (1, hidden_dim), jnp.float32,
                                 -bound1, bound1),
        "bn_g": jnp.ones((1, hidden_dim), jnp.float32),
        "bn_b": jnp.zeros((1, hidden_dim), jnp.float32),
        "w2": jax.random.uniform(k3, (hidden_dim, output_dim), jnp.float32,
                                 -bound2, bound2),
        "b2": jax.random.uniform(k4, (1, output_dim), jnp.float32,
                                 -bound2, bound2),
    }


def reference_forward(x, p):
    """Pure-JAX f32 reference (training-mode BatchNorm1d, batch stats)."""
    mu = jnp.mean(x, axis=-1, keepdims=True)
    var = jnp.mean((x - mu) ** 2, axis=-1, keepdims=True)
    xn = (x - mu) / jnp.sqrt(var + LN_EPS) * p["ln_g"] + p["ln_b"]
    h = xn @ p["w1"] + p["b1"]
    bm = jnp.mean(h, axis=0, keepdims=True)
    bv = jnp.mean((h - bm) ** 2, axis=0, keepdims=True)
    hn = (h - bm) / jnp.sqrt(bv + BN_EPS) * p["bn_g"] + p["bn_b"]
    hn = jnp.maximum(hn, 0.0)
    y = hn @ p["w2"] + p["b2"]
    return y / jnp.maximum(jnp.linalg.norm(y, axis=1, keepdims=True), L2_EPS)


if __name__ == "__main__":
    # Small shapes that still exercise the batch grid (2 tiles of 128 with
    # masked pad rows) and the lane-padding paths (D/H/O padded to 128).
    B, D, H, O = 200, 40, 96, 24
    key = jax.random.PRNGKey(0)
    kx, kp = jax.random.split(key)
    x = jax.random.normal(kx, (B, D), jnp.float32)
    params = init_params(kp, D, H, O)

    fwd = jax.jit(projection_head)
    out = jax.block_until_ready(fwd(x, params))

    ref = reference_forward(x, params)
    assert out.shape == (B, O)
    # bf16 matmul operands (f32 accumulation) -> tolerance loosened vs the
    # pure-f32 reference, per the perf-review correctness note.
    err = float(jnp.max(jnp.abs(out - ref)))
    assert err < 2e-2, f"mismatch vs reference: max abs err {err}"
    nrm = jnp.linalg.norm(out, axis=1)
    assert bool(jnp.allclose(nrm, 1.0, atol=1e-3)), "rows not unit-norm"
    print("KERNEL_OK")
</pallas_src>

<mosaic_0001>
module attributes {stable_mosaic.version = 11 : i64} {
  func.func @_stage1_kernel(%arg0: i32, %arg1: memref<128x128xf32, #tpu.memory_space<vmem>>, %arg2: memref<1x128xf32, #tpu.memory_space<vmem>>, %arg3: memref<1x128xf32, #tpu.memory_space<vmem>>, %arg4: memref<128x128xbf16, #tpu.memory_space<vmem>>, %arg5: memref<1x128xf32, #tpu.memory_space<vmem>>, %arg6: memref<128x128xf32, #tpu.memory_space<vmem>>, %arg7: memref<1x2x128xf32, #tpu.memory_space<vmem>>) attributes {dimension_semantics = [#tpu.dimension_semantics<parallel>], iteration_bounds = array<i64: 2>, scalar_prefetch = 0 : i64, scratch_operands = 0 : i64, tpu.core_type = #tpu.core_type<tc>, window_params = [{transform_indices = @transform_0, window_bounds = array<i64: 128, 128>}, {pipeline_mode = #tpu.pipeline_mode<synchronous>, transform_indices = @transform_1, window_bounds = array<i64: 1, 128>}, {pipeline_mode = #tpu.pipeline_mode<synchronous>, transform_indices = @transform_2, window_bounds = array<i64: 1, 128>}, {pipeline_mode = #tpu.pipeline_mode<synchronous>, transform_indices = @transform_3, window_bounds = array<i64: 128, 128>}, {pipeline_mode = #tpu.pipeline_mode<synchronous>, transform_indices = @transform_4, window_bounds = array<i64: 1, 128>}, {transform_indices = @transform_5, window_bounds = array<i64: 128, 128>}, {transform_indices = @transform_6, window_bounds = array<i64: 1, 2, 128>}]} {
    %c0 = arith.constant 0 : index
    %c0_0 = arith.constant 0 : index
    %0 = vector.load %arg1[%c0, %c0_0] : memref<128x128xf32, #tpu.memory_space<vmem>>, vector<128x128xf32>
    %cst = arith.constant dense<0.000000e+00> : vector<128xf32>
    %1 = vector.multi_reduction <add>, %0, %cst [1] : vector<128x128xf32> to vector<128xf32>
    %2 = vector.shape_cast %1 : vector<128xf32> to vector<128x1xf32>
    %cst_1 = arith.constant 2.500000e-02 : f32
    %3 = vector.broadcast %cst_1 : f32 to vector<128x1xf32>
    %4 = arith.mulf %2, %3 : vector<128x1xf32>
    %5 = tpu.iota {dimensions = array<i32: 1>} : vector<1x128xi32>
    %c40_i32 = arith.constant 40 : i32
    %6 = vector.broadcast %c40_i32 : i32 to vector<1x128xi32>
    %7 = arith.cmpi slt, %5, %6 : vector<1x128xi32>
    %8 = vector.broadcast %4 : vector<128x1xf32> to vector<128x128xf32>
    %9 = arith.subf %0, %8 : vector<128x128xf32>
    %cst_2 = arith.constant 0.000000e+00 : f32
    %10 = vector.shape_cast %7 : vector<1x128xi1> to vector<1x128xi1>
    %11 = vector.broadcast %10 : vector<1x128xi1> to vector<128x128xi1>
    %12 = vector.broadcast %cst_2 : f32 to vector<128x128xf32>
    %13 = arith.select %11, %9, %12 : vector<128x128xi1>, vector<128x128xf32>
    %14 = arith.mulf %13, %13 : vector<128x128xf32>
    %cst_3 = arith.constant dense<0.000000e+00> : vector<128xf32>
    %15 = vector.multi_reduction <add>, %14, %cst_3 [1] : vector<128x128xf32> to vector<128xf32>
    %16 = vector.shape_cast %15 : vector<128xf32> to vector<128x1xf32>
    %cst_4 = arith.constant 2.500000e-02 : f32
    %17 = vector.broadcast %cst_4 : f32 to vector<128x1xf32>
    %18 = arith.mulf %16, %17 : vector<128x1xf32>
    %cst_5 = arith.constant 9.99999974E-6 : f32
    %19 = vector.broadcast %cst_5 : f32 to vector<128x1xf32>
    %20 = arith.addf %18, %19 : vector<128x1xf32>
    %21 = math.rsqrt %20 : vector<128x1xf32>
    %22 = vector.broadcast %21 : vector<128x1xf32> to vector<128x128xf32>
    %23 = arith.mulf %13, %22 : vector<128x128xf32>
    %c0_6 = arith.constant 0 : index
    %c0_7 = arith.constant 0 : index
    %24 = vector.load %arg2[%c0_6, %c0_7] : memref<1x128xf32, #tpu.memory_space<vmem>>, vector<1x128xf32>
    %25 = vector.broadcast %24 : vector<1x128xf32> to vector<128x128xf32>
    %26 = arith.mulf %23, %25 : vector<128x128xf32>
    %c0_8 = arith.constant 0 : index
    %c0_9 = arith.constant 0 : index
    %27 = vector.load %arg3[%c0_8, %c0_9] : memref<1x128xf32, #tpu.memory_space<vmem>>, vector<1x128xf32>
    %28 = vector.broadcast %27 : vector<1x128xf32> to vector<128x128xf32>
    %29 = arith.addf %26, %28 : vector<128x128xf32>
    %30 = arith.truncf %29 : vector<128x128xf32> to vector<128x128xbf16>
    %c0_10 = arith.constant 0 : index
    %c0_11 = arith.constant 0 : index
    %31 = vector.load %arg4[%c0_10, %c0_11] : memref<128x128xbf16, #tpu.memory_space<vmem>>, vector<128x128xbf16>
    %cst_12 = arith.constant dense<0.000000e+00> : vector<128x128xf32>
    %32 = tpu.matmul %30, %31, %cst_12 {dimension_numbers = #tpu.dot_dimension_numbers<[1], [0], [0], [1], [0, 0, 1, 1], [], []>} : vector<128x128xbf16>, vector<128x128xbf16>, vector<128x128xf32> -> vector<128x128xf32>
    %c0_13 = arith.constant 0 : index
    %c0_14 = arith.constant 0 : index
    %33 = vector.load %arg5[%c0_13, %c0_14] : memref<1x128xf32, #tpu.memory_space<vmem>>, vector<1x128xf32>
    %34 = vector.broadcast %33 : vector<1x128xf32> to vector<128x128xf32>
    %35 = arith.addf %32, %34 : vector<128x128xf32>
    %c0_15 = arith.constant 0 : index
    %c0_16 = arith.constant 0 : index
    %36 = vector.load %arg6[%c0_15, %c0_16] : memref<128x128xf32, #tpu.memory_space<vmem>>, vector<128x128xf32>
    tpu.vector_store %arg6[%c0_15, %c0_16], %35 {strides = array<i32>} : memref<128x128xf32, #tpu.memory_space<vmem>>, vector<128x128xf32>,
    %c128_i32 = arith.constant 128 : i32
    %37 = arith.muli %arg0, %c128_i32 : i32
    %38 = tpu.iota {dimensions = array<i32: 0>} : vector<128x1xi32>
    %39 = vector.broadcast %37 : i32 to vector<128x1xi32>
    %40 = arith.addi %38, %39 : vector<128x1xi32>
    %c200_i32 = arith.constant 200 : i32
    %41 = vector.broadcast %c200_i32 : i32 to vector<128x1xi32>
    %42 = arith.cmpi slt, %40, %41 : vector<128x1xi32>
    %cst_17 = arith.constant 0.000000e+00 : f32
    %43 = vector.shape_cast %42 : vector<128x1xi1> to vector<128x1xi1>
    %44 = vector.broadcast %43 : vector<128x1xi1> to vector<128x128xi1>
    %45 = vector.broadcast %cst_17 : f32 to vector<128x128xf32>
    %46 = arith.select %44, %35, %45 : vector<128x128xi1>, vector<128x128xf32>
    %cst_18 = arith.constant dense<0.000000e+00> : vector<128xf32>
    %47 = vector.multi_reduction <add>, %46, %cst_18 [0] : vector<128x128xf32> to vector<128xf32>
    %48 = vector.shape_cast %47 : vector<128xf32> to vector<1x128xf32>
    %49 = arith.mulf %46, %46 : vector<128x128xf32>
    %cst_19 = arith.constant dense<0.000000e+00> : vector<128xf32>
    %50 = vector.multi_reduction <add>, %49, %cst_19 [0] : vector<128x128xf32> to vector<128xf32>
    %51 = vector.shape_cast %50 : vector<128xf32> to vector<1x128xf32>
    %52 = tpu.concatenate %48, %51 in 0 : vector<1x128xf32>, vector<1x128xf32> -> vector<2x128xf32>
    %53 = vector.shape_cast %52 : vector<2x128xf32> to vector<1x2x128xf32>
    %c0_20 = arith.constant 0 : index
    %c0_21 = arith.constant 0 : index
    %c0_22 = arith.constant 0 : index
    %54 = vector.load %arg7[%c0_20, %c0_21, %c0_22] : memref<1x2x128xf32, #tpu.memory_space<vmem>>, vector<1x2x128xf32>
    tpu.vector_store %arg7[%c0_20, %c0_21, %c0_22], %53 {strides = array<i32>} : memref<1x2x128xf32, #tpu.memory_space<vmem>>, vector<1x2x128xf32>,
    return
  }
  func.func @transform_0(%arg0: i32) -> (i32, i32) {
    %c0_i32 = arith.constant 0 : i32
    %c0_i32_0 = arith.constant 0 : i32
    return %arg0, %c0_i32 : i32, i32
  }
  func.func @transform_1(%arg0: i32) -> (i32, i32) {
    %c0_i32 = arith.constant 0 : i32
    %c0_i32_0 = arith.constant 0 : i32
    %c0_i32_1 = arith.constant 0 : i32
    return %c0_i32, %c0_i32_0 : i32, i32
  }
  func.func @transform_2(%arg0: i32) -> (i32, i32) {
    %c0_i32 = arith.constant 0 : i32
    %c0_i32_0 = arith.constant 0 : i32
    %c0_i32_1 = arith.constant 0 : i32
    return %c0_i32, %c0_i32_0 : i32, i32
  }
  func.func @transform_3(%arg0: i32) -> (i32, i32) {
    %c0_i32 = arith.constant 0 : i32
    %c0_i32_0 = arith.constant 0 : i32
    %c0_i32_1 = arith.constant 0 : i32
    return %c0_i32, %c0_i32_0 : i32, i32
  }
  func.func @transform_4(%arg0: i32) -> (i32, i32) {
    %c0_i32 = arith.constant 0 : i32
    %c0_i32_0 = arith.constant 0 : i32
    %c0_i32_1 = arith.constant 0 : i32
    return %c0_i32, %c0_i32_0 : i32, i32
  }
  func.func @transform_5(%arg0: i32) -> (i32, i32) {
    %c0_i32 = arith.constant 0 : i32
    %c0_i32_0 = arith.constant 0 : i32
    return %arg0, %c0_i32 : i32, i32
  }
  func.func @transform_6(%arg0: i32) -> (i32, i32, i32) {
    %c0_i32 = arith.constant 0 : i32
    %c0_i32_0 = arith.constant 0 : i32
    %c0_i32_1 = arith.constant 0 : i32
    return %arg0, %c0_i32, %c0_i32_0 : i32, i32, i32
  }
}

module attributes {stable_mosaic.version = 11 : i64} {
  func.func @_stage2_kernel(%arg0: i32, %arg1: memref<128x128xf32, #tpu.memory_space<vmem>>, %arg2: memref<1x128xf32, #tpu.memory_space<vmem>>, %arg3: memref<1x128xf32, #tpu.memory_space<vmem>>, %arg4: memref<128x128xbf16, #tpu.memory_space<vmem>>, %arg5: memref<1x128xf32, #tpu.memory_space<vmem>>, %arg6: memref<128x128xf32, #tpu.memory_space<vmem>>) attributes {dimension_semantics = [#tpu.dimension_semantics<parallel>], iteration_bounds = array<i64: 2>, scalar_prefetch = 0 : i64, scratch_operands = 0 : i64, tpu.core_type = #tpu.core_type<tc>, window_params = [{transform_indices = @transform_0, window_bounds = array<i64: 128, 128>}, {pipeline_mode = #tpu.pipeline_mode<synchronous>, transform_indices = @transform_1, window_bounds = array<i64: 1, 128>}, {pipeline_mode = #tpu.pipeline_mode<synchronous>, transform_indices = @transform_2, window_bounds = array<i64: 1, 128>}, {pipeline_mode = #tpu.pipeline_mode<synchronous>, transform_indices = @transform_3, window_bounds = array<i64: 128, 128>}, {pipeline_mode = #tpu.pipeline_mode<synchronous>, transform_indices = @transform_4, window_bounds = array<i64: 1, 128>}, {transform_indices = @transform_5, window_bounds = array<i64: 128, 128>}]} {
    %c0 = arith.constant 0 : index
    %c0_0 = arith.constant 0 : index
    %0 = vector.load %arg1[%c0, %c0_0] : memref<128x128xf32, #tpu.memory_space<vmem>>, vector<128x128xf32>
    %c0_1 = arith.constant 0 : index
    %c0_2 = arith.constant 0 : index
    %1 = vector.load %arg2[%c0_1, %c0_2] : memref<1x128xf32, #tpu.memory_space<vmem>>, vector<1x128xf32>
    %2 = vector.broadcast %1 : vector<1x128xf32> to vector<128x128xf32>
    %3 = arith.mulf %0, %2 : vector<128x128xf32>
    %c0_3 = arith.constant 0 : index
    %c0_4 = arith.constant 0 : index
    %4 = vector.load %arg3[%c0_3, %c0_4] : memref<1x128xf32, #tpu.memory_space<vmem>>, vector<1x128xf32>
    %5 = vector.broadcast %4 : vector<1x128xf32> to vector<128x128xf32>
    %6 = arith.addf %3, %5 : vector<128x128xf32>
    %cst = arith.constant 0.000000e+00 : f32
    %7 = vector.broadcast %cst : f32 to vector<128x128xf32>
    %8 = arith.maximumf %6, %7 : vector<128x128xf32>
    %9 = arith.truncf %8 : vector<128x128xf32> to vector<128x128xbf16>
    %c0_5 = arith.constant 0 : index
    %c0_6 = arith.constant 0 : index
    %10 = vector.load %arg4[%c0_5, %c0_6] : memref<128x128xbf16, #tpu.memory_space<vmem>>, vector<128x128xbf16>
    %cst_7 = arith.constant dense<0.000000e+00> : vector<128x128xf32>
    %11 = tpu.matmul %9, %10, %cst_7 {dimension_numbers = #tpu.dot_dimension_numbers<[1], [0], [0], [1], [0, 0, 1, 1], [], []>} : vector<128x128xbf16>, vector<128x128xbf16>, vector<128x128xf32> -> vector<128x128xf32>
    %c0_8 = arith.constant 0 : index
    %c0_9 = arith.constant 0 : index
    %12 = vector.load %arg5[%c0_8, %c0_9] : memref<1x128xf32, #tpu.memory_space<vmem>>, vector<1x128xf32>
    %13 = vector.broadcast %12 : vector<1x128xf32> to vector<128x128xf32>
    %14 = arith.addf %11, %13 : vector<128x128xf32>
    %15 = arith.mulf %14, %14 : vector<128x128xf32>
    %cst_10 = arith.constant dense<0.000000e+00> : vector<128xf32>
    %16 = vector.multi_reduction <add>, %15, %cst_10 [1] : vector<128x128xf32> to vector<128xf32>
    %17 = vector.shape_cast %16 : vector<128xf32> to vector<128x1xf32>
    %cst_11 = arith.constant 1.000000e-24 : f32
    %18 = vector.broadcast %cst_11 : f32 to vector<128x1xf32>
    %19 = arith.maximumf %17, %18 : vector<128x1xf32>
    %20 = math.rsqrt %19 : vector<128x1xf32>
    %21 = vector.broadcast %20 : vector<128x1xf32> to vector<128x128xf32>
    %22 = arith.mulf %14, %21 : vector<128x128xf32>
    %c0_12 = arith.constant 0 : index
    %c0_13 = arith.constant 0 : index
    %23 = vector.load %arg6[%c0_12, %c0_13] : memref<128x128xf32, #tpu.memory_space<vmem>>, vector<128x128xf32>
    tpu.vector_store %arg6[%c0_12, %c0_13], %22 {strides = array<i32>} : memref<128x128xf32, #tpu.memory_space<vmem>>, vector<128x128xf32>,
    return
  }
  func.func @transform_0(%arg0: i32) -> (i32, i32) {
    %c0_i32 = arith.constant 0 : i32
    %c0_i32_0 = arith.constant 0 : i32
    return %arg0, %c0_i32 : i32, i32
  }
  func.func @transform_1(%arg0: i32) -> (i32, i32) {
    %c0_i32 = arith.constant 0 : i32
    %c0_i32_0 = arith.constant 0 : i32
    %c0_i32_1 = arith.constant 0 : i32
    return %c0_i32, %c0_i32_0 : i32, i32
  }
  func.func @transform_2(%arg0: i32) -> (i32, i32) {
    %c0_i32 = arith.constant 0 : i32
    %c0_i32_0 = arith.constant 0 : i32
    %c0_i32_1 = arith.constant 0 : i32
    return %c0_i32, %c0_i32_0 : i32, i32
  }
  func.func @transform_3(%arg0: i32) -> (i32, i32) {
    %c0_i32 = arith.constant 0 : i32
    %c0_i32_0 = arith.constant 0 : i32
    %c0_i32_1 = arith.constant 0 : i32
    return %c0_i32, %c0_i32_0 : i32, i32
  }
  func.func @transform_4(%arg0: i32) -> (i32, i32) {
    %c0_i32 = arith.constant 0 : i32
    %c0_i32_0 = arith.constant 0 : i32
    %c0_i32_1 = arith.constant 0 : i32
    return %c0_i32, %c0_i32_0 : i32, i32
  }
  func.func @transform_5(%arg0: i32) -> (i32, i32) {
    %c0_i32 = arith.constant 0 : i32
    %c0_i32_0 = arith.constant 0 : i32
    return %arg0, %c0_i32 : i32, i32
  }
}

</mosaic_0001>

<llo_original>
// kernel: projection_head.3
$region0: #{projection_head.3}
  #allocation0 [shape = 'u32[]', space=smem, size = 0x4, offset = 0x4, fixed_abs, tag = 'smem constant byte address 0x4 - core index']
  #allocation1 [shape = 'u32[72,128]{1,0:T(1,128)}', space=vmem, size = 0x9000, scoped, tag = 'internal scratch']
  %s0 = inlined_call_operand.vmem [shape: f32[256,128], index: 0, kind: input, shape index: {}]
  %s1 = inlined_call_operand.vmem [shape: f32[1,128], index: 1, kind: input, shape index: {}]
  %s2 = inlined_call_operand.vmem [shape: f32[1,128], index: 2, kind: input, shape index: {}]
  %s3 = inlined_call_operand.vmem [shape: bf16[128,128], index: 3, kind: input, shape index: {}]
  %s4 = inlined_call_operand.vmem [shape: f32[1,128], index: 4, kind: input, shape index: {}]
  %s5 = inlined_call_operand.vmem [shape: f32[256,128], index: 5, kind: output, shape index: {}]
  %s6 = sld [smem:[#allocation0]]
  $region53: #{projection_head.3} parent=0
    _
  %s8 = ssub.s32 1, %s6
  %s9 = scalar_select 0, %s8, %s6
  loop: start=0, step=1, limit=4
  $region2: #{projection_head.3} parent=0 // loop_pre_header
    _
  $region3: #{projection_head.3} parent=0 // loop_header
    %s11 = sphi 0, %s15
    %p12 = scmp.ge.s32.totalorder %s11, 4
    %s21 = sphi 0, %s23
    %s24 = sphi 0, %s21
    %s25 = sphi 0, %s24
    %s41 = sphi 0, %s25
    %s45 = sphi 0, %s45
    %s47 = sphi 0, %s45
    %s48 = sphi 0, %s47
    %s62 = sphi 0, %s48
    %s66 = sphi 0, %s66
    %s68 = sphi 0, %s66
    %s69 = sphi 0, %s68
    %s83 = sphi 0, %s69
    %s87 = sphi 0, %s87
    %s89 = sphi 0, %s87
    %s90 = sphi 0, %s89
    %s104 = sphi 0, %s90
    %s108 = sphi 0, %s108
    %s110 = sphi 0, %s108
    %s111 = sphi 0, %s110
    %s125 = sphi 0, %s111
    %s131 = sphi 0, %s133
    %s134 = sphi 0, %s131
    %s135 = sphi 0, %s134
    %s151 = sphi 0, %s135
  $region4: #{projection_head.3} parent=0 // loop_header_branch
    %14 = sbr.rel (%p12) target = $region8
  $region5: #{projection_head.3} parent=0 // loop_body
    %s16 = ssub.s32 %s11, 1
    %s17 = ssub.s32 %s11, 2
    %s18 = sadd.s32 %s11, 1
    %s19 = ssub.s32 %s11, %s18
    %p20 = scmp.eq.s32.totalorder %s19, 0
    %s22 = sadd.s32 %s21, 1
    %s23 = scalar_select %p20, %s21, %s22
    %p26 = pneg %p20
    %p27 = scmp.eq.s32.totalorder %s11, 1
    %p28 = por %p26, %p27
    %p29 = scmp.ne.s32.totalorder %s21, %s24
    %p30 = scmp.eq.s32.totalorder %s11, 0
    %p31 = por %p29, %p30
    %p32 = scmp.ne.s32.totalorder %s21, %s24
    %p33 = scmp.eq.s32.totalorder %s16, 1
    %p34 = por %p32, %p33
    %p35 = scmp.ne.s32.totalorder %s24, %s25
    %p36 = scmp.eq.s32.totalorder %s16, 0
    %p37 = por %p35, %p36
    %p38 = scmp.ne.s32.totalorder %s24, %s25
    %p39 = scmp.eq.s32.totalorder %s17, 1
    %p40 = por %p38, %p39
    %p42 = scmp.ne.s32.totalorder %s25, %s41
    %p43 = scmp.eq.s32.totalorder %s17, 0
    %p44 = por %p42, %p43
    %s46 = sadd.s32 %s45, 1
    %p49 = scmp.eq.s32.totalorder %s11, 1
    %p50 = scmp.ne.s32.totalorder %s45, %s47
    %p51 = scmp.eq.s32.totalorder %s11, 0
    %p52 = por %p50, %p51
    %p53 = scmp.ne.s32.totalorder %s45, %s47
    %p54 = scmp.eq.s32.totalorder %s16, 1
    %p55 = por %p53, %p54
    %p56 = scmp.ne.s32.totalorder %s47, %s48
    %p57 = scmp.eq.s32.totalorder %s16, 0
    %p58 = por %p56, %p57
    %p59 = scmp.ne.s32.totalorder %s47, %s48
    %p60 = scmp.eq.s32.totalorder %s17, 1
    %p61 = por %p59, %p60
    %p63 = scmp.ne.s32.totalorder %s48, %s62
    %p64 = scmp.eq.s32.totalorder %s17, 0
    %p65 = por %p63, %p64
    %s67 = sadd.s32 %s66, 1
    %p70 = scmp.eq.s32.totalorder %s11, 1
    %p71 = scmp.ne.s32.totalorder %s66, %s68
    %p72 = scmp.eq.s32.totalorder %s11, 0
    %p73 = por %p71, %p72
    %p74 = scmp.ne.s32.totalorder %s66, %s68
    %p75 = scmp.eq.s32.totalorder %s16, 1
    %p76 = por %p74, %p75
    %p77 = scmp.ne.s32.totalorder %s68, %s69
    %p78 = scmp.eq.s32.totalorder %s16, 0
    %p79 = por %p77, %p78
    %p80 = scmp.ne.s32.totalorder %s68, %s69
    %p81 = scmp.eq.s32.totalorder %s17, 1
    %p82 = por %p80, %p81
    %p84 = scmp.ne.s32.totalorder %s69, %s83
    %p85 = scmp.eq.s32.totalorder %s17, 0
    %p86 = por %p84, %p85
    %s88 = sadd.s32 %s87, 1
    %p91 = scmp.eq.s32.totalorder %s11, 1
    %p92 = scmp.ne.s32.totalorder %s87, %s89
    %p93 = scmp.eq.s32.totalorder %s11, 0
    %p94 = por %p92, %p93
    %p95 = scmp.ne.s32.totalorder %s87, %s89
    %p96 = scmp.eq.s32.totalorder %s16, 1
    %p97 = por %p95, %p96
    %p98 = scmp.ne.s32.totalorder %s89, %s90
    %p99 = scmp.eq.s32.totalorder %s16, 0
    %p100 = por %p98, %p99
    %p101 = scmp.ne.s32.totalorder %s89, %s90
    %p102 = scmp.eq.s32.totalorder %s17, 1
    %p103 = por %p101, %p102
    %p105 = scmp.ne.s32.totalorder %s90, %s104
    %p106 = scmp.eq.s32.totalorder %s17, 0
    %p107 = por %p105, %p106
    %s109 = sadd.s32 %s108, 1
    %p112 = scmp.eq.s32.totalorder %s11, 1
    %p113 = scmp.ne.s32.totalorder %s108, %s110
    %p114 = scmp.eq.s32.totalorder %s11, 0
    %p115 = por %p113, %p114
    %p116 = scmp.ne.s32.totalorder %s108, %s110
    %p117 = scmp.eq.s32.totalorder %s16, 1
    %p118 = por %p116, %p117
    %p119 = scmp.ne.s32.totalorder %s110, %s111
    %p120 = scmp.eq.s32.totalorder %s16, 0
    %p121 = por %p119, %p120
    %p122 = scmp.ne.s32.totalorder %s110, %s111
    %p123 = scmp.eq.s32.totalorder %s17, 1
    %p124 = por %p122, %p123
    %p126 = scmp.ne.s32.totalorder %s111, %s125
    %p127 = scmp.eq.s32.totalorder %s17, 0
    %p128 = por %p126, %p127
    %s129 = ssub.s32 %s11, %s18
    %p130 = scmp.eq.s32.totalorder %s129, 0
    %s132 = sadd.s32 %s131, 1
    %s133 = scalar_select %p130, %s131, %s132
    %p136 = pneg %p130
    %p137 = scmp.eq.s32.totalorder %s11, 1
    %p138 = por %p136, %p137
    %p139 = scmp.ne.s32.totalorder %s131, %s134
    %p140 = scmp.eq.s32.totalorder %s11, 0
    %p141 = por %p139, %p140
    %p142 = scmp.ne.s32.totalorder %s131, %s134
    %p143 = scmp.eq.s32.totalorder %s16, 1
    %p144 = por %p142, %p143
    %p145 = scmp.ne.s32.totalorder %s134, %s135
    %p146 = scmp.eq.s32.totalorder %s16, 0
    %p147 = por %p145, %p146
    %p148 = scmp.ne.s32.totalorder %s134, %s135
    %p149 = scmp.eq.s32.totalorder %s17, 1
    %p150 = por %p148, %p149
    %p152 = scmp.ne.s32.totalorder %s135, %s151
    %p153 = scmp.eq.s32.totalorder %s17, 0
    %p154 = por %p152, %p153
    %p155 = scmp.le.s32.totalorder 1, %s11
    %p156 = scmp.lt.s32.totalorder %s11, 3
    %p157 = pnand %p155, %p156
    %p158 = pneg %p157
    // Predicated region
    $region9: #{projection_head.3} parent=5 // pred_check
      _
    $region10: #{projection_head.3} parent=5 // pred_check_branch
      %160 = sbr.rel (%p157) target = $region12
    $region11: #{projection_head.3} parent=5 // pred_region
      %s161 = ssub.s32 %s11, 1
      // Predicated region
      $region13: #{projection_head.3} parent=11 // pred_check
        %p162 = pneg %p58
      $region14: #{projection_head.3} parent=11 // pred_check_branch
        %164 = sbr.rel (%p162) target = $region16
      $region15: #{projection_head.3} parent=11 // pred_region
        _
      $region16: #{projection_head.3} parent=11 // pred_fallthru
        _
      // Predicated region
      $region17: #{projection_head.3} parent=11 // pred_check
        %p165 = pneg %p79
      $region18: #{projection_head.3} parent=11 // pred_check_branch
        %167 = sbr.rel (%p165) target = $region20
      $region19: #{projection_head.3} parent=11 // pred_region
        _
      $region20: #{projection_head.3} parent=11 // pred_fallthru
        _
      // Predicated region
      $region21: #{projection_head.3} parent=11 // pred_check
        %p168 = pneg %p100
      $region22: #{projection_head.3} parent=11 // pred_check_branch
        %170 = sbr.rel (%p168) target = $region24
      $region23: #{projection_head.3} parent=11 // pred_region
        _
      $region24: #{projection_head.3} parent=11 // pred_fallthru
        _
      // Predicated region
      $region25: #{projection_head.3} parent=11 // pred_check
        %p171 = pneg %p121
      $region26: #{projection_head.3} parent=11 // pred_check_branch
        %173 = sbr.rel (%p171) target = $region28
      $region27: #{projection_head.3} parent=11 // pred_region
        _
      $region28: #{projection_head.3} parent=11 // pred_fallthru
        _
    $region12: #{projection_head.3} parent=5 // pred_fallthru
      _
    %p174 = scmp.lt.s32.totalorder %s11, 2
    // Predicated region
    $region29: #{projection_head.3} parent=5 // pred_check
      %p175 = pneg %p174
    $region30: #{projection_head.3} parent=5 // pred_check_branch
      %177 = sbr.rel (%p175) target = $region32
    $region31: #{projection_head.3} parent=5 // pred_region
      // Predicated region
      $region33: #{projection_head.3} parent=31 // pred_check
        %p178 = pneg %p31
      $region34: #{projection_head.3} parent=31 // pred_check_branch
        %180 = sbr.rel (%p178) target = $region36
      $region35: #{projection_head.3} parent=31 // pred_region
        %s181 = smul.u32 16, %s11
        %p182 = scmp.lt.s32.totalorder %s181, 31
        %s183 = scalar_select %p182, %s181, 31
        %s184 = smul.addr %s183, 8
        %s185 = scalar_lea.vmem %s0, %s184
        %s186 = smul.u32 16, %s11
      $region36: #{projection_head.3} parent=31 // pred_fallthru
        _
    $region32: #{projection_head.3} parent=5 // pred_fallthru
      _
    %p187 = scmp.le.s32.totalorder 1, %s11
    %p188 = scmp.lt.s32.totalorder %s11, 3
    %p189 = pnand %p187, %p188
    %p190 = pneg %p189
    // Predicated region
    $region37: #{projection_head.3} parent=5 // pred_check
      _
    $region38: #{projection_head.3} parent=5 // pred_check_branch
      %192 = sbr.rel (%p189) target = $region40
    $region39: #{projection_head.3} parent=5 // pred_region
      %s193 = ssub.s32 %s11, 1
      %s194 = smul.u32 16, %s16
      %p195 = scmp.lt.s32.totalorder %s194, 31
      %s196 = scalar_select %p195, %s194, 31
      %s197 = smul.addr %s196, 8
      %s198 = scalar_lea.vmem %s0, %s197
      %p199 = pneg %p37
      %p200 = pneg %p34
      %p201 = pneg %p58
      %p202 = pneg %p55
      %p203 = pneg %p79
      %p204 = pneg %p76
      %p205 = pneg %p100
      %p206 = pneg %p97
      %p207 = pneg %p121
      %p208 = pneg %p118
      %p209 = pneg %p147
      %p210 = pneg %p144
      %s211 = smul.u32 16, %s16
      %p212 = scmp.lt.s32.totalorder %s211, 31
      %s213 = scalar_select %p212, %s211, 31
      %s214 = smul.addr %s213, 8
      %s215 = scalar_lea.vmem %s5, %s214
      %s216 = smul.u32 16, %s16
      %p217 = scmp.lt.s32.totalorder %s216, 31
      %s218 = scalar_select %p217, %s216, 31
      %s219 = smul.addr %s218, 8
      %s220 = scalar_lea.vmem %s0, %s219
      %s221 = smul.u32 16, %s16
      %s222 = smul.u32 16, %s16
      %p223 = scmp.lt.s32.totalorder %s222, 31
      %s224 = scalar_select %p223, %s222, 31
      %s225 = smul.addr %s224, 8
      %s226 = scalar_lea.vmem %s5, %s225
      %s227 = smul.u32 16, %s16
      %v228 = vld [vmem:[%s220] sm:$0xff]
      %v229 = vld [vmem:[%s220 + $0x8] sm:$0xff]
      %v230 = vld [vmem:[%s220 + $0x10] sm:$0xff]
      %v231 = vld [vmem:[%s220 + $0x18] sm:$0xff]
      %v232 = vld [vmem:[%s220 + $0x20] sm:$0xff]
      %v233 = vld [vmem:[%s220 + $0x28] sm:$0xff]
      %v234 = vld [vmem:[%s220 + $0x30] sm:$0xff]
      %v235 = vld [vmem:[%s220 + $0x38] sm:$0xff]
      %v236 = vld [vmem:[%s220 + $0x40] sm:$0xff]
      %v237 = vld [vmem:[%s220 + $0x48] sm:$0xff]
      %v238 = vld [vmem:[%s220 + $0x50] sm:$0xff]
      %v239 = vld [vmem:[%s220 + $0x58] sm:$0xff]
      %v240 = vld [vmem:[%s220 + $0x60] sm:$0xff]
      %v241 = vld [vmem:[%s220 + $0x68] sm:$0xff]
      %v242 = vld [vmem:[%s220 + $0x70] sm:$0xff]
      %v243 = vld [vmem:[%s220 + $0x78] sm:$0xff]
      %v244 = vld [vmem:[%s1] sm:$0x1]
      %v246 = vperm.slane %v244, 0
      %v248 = vmul.f32 %v228, %v246
      %v249 = vmul.f32 %v229, %v246
      %v250 = vmul.f32 %v230, %v246
      %v251 = vmul.f32 %v231, %v246
      %v252 = vmul.f32 %v232, %v246
      %v253 = vmul.f32 %v233, %v246
      %v254 = vmul.f32 %v234, %v246
      %v255 = vmul.f32 %v235, %v246
      %v256 = vmul.f32 %v236, %v246
      %v257 = vmul.f32 %v237, %v246
      %v258 = vmul.f32 %v238, %v246
      %v259 = vmul.f32 %v239, %v246
      %v260 = vmul.f32 %v240, %v246
      %v261 = vmul.f32 %v241, %v246
      %v262 = vmul.f32 %v242, %v246
      %v263 = vmul.f32 %v243, %v246
      %v264 = vld [vmem:[%s2] sm:$0x1]
      %v266 = vperm.slane %v264, 0
      %v268 = vadd.f32 %v248, %v266
      %v269 = vadd.f32 %v249, %v266
      %v270 = vadd.f32 %v250, %v266
      %v271 = vadd.f32 %v251, %v266
      %v272 = vadd.f32 %v252, %v266
      %v273 = vadd.f32 %v253, %v266
      %v274 = vadd.f32 %v254, %v266
      %v275 = vadd.f32 %v255, %v266
      %v276 = vadd.f32 %v256, %v266
      %v277 = vadd.f32 %v257, %v266
      %v278 = vadd.f32 %v258, %v266
      %v279 = vadd.f32 %v259, %v266
      %v280 = vadd.f32 %v260, %v266
      %v281 = vadd.f32 %v261, %v266
      %v282 = vadd.f32 %v262, %v266
      %v283 = vadd.f32 %v263, %v266
      %v284 = vmax.f32 %v268, 0.0
      %v285 = vmax.f32 %v269, 0.0
      %v286 = vmax.f32 %v270, 0.0
      %v287 = vmax.f32 %v271, 0.0
      %v288 = vmax.f32 %v272, 0.0
      %v289 = vmax.f32 %v273, 0.0
      %v290 = vmax.f32 %v274, 0.0
      %v291 = vmax.f32 %v275, 0.0
      %v292 = vmax.f32 %v276, 0.0
      %v293 = vmax.f32 %v277, 0.0
      %v294 = vmax.f32 %v278, 0.0
      %v295 = vmax.f32 %v279, 0.0
      %v296 = vmax.f32 %v280, 0.0
      %v297 = vmax.f32 %v281, 0.0
      %v298 = vmax.f32 %v282, 0.0
      %v299 = vmax.f32 %v283, 0.0
      %v300 = vpack.c.bf16 %v285, %v284
      %v301 = vpack.c.bf16 %v287, %v286
      %v302 = vpack.c.bf16 %v289, %v288
      %v303 = vpack.c.bf16 %v291, %v290
      %v304 = vpack.c.bf16 %v293, %v292
      %v305 = vpack.c.bf16 %v295, %v294
      %v306 = vpack.c.bf16 %v297, %v296
      %v307 = vpack.c.bf16 %v299, %v298
      %v308 = vld [vmem:[%s3] sm:$0xf]
      %v309 = vld [vmem:[%s3 + $0x4] sm:$0xf]
      %v310 = vld [vmem:[%s3 + $0x8] sm:$0xf]
      %v311 = vld [vmem:[%s3 + $0xc] sm:$0xf]
      %v312 = vld [vmem:[%s3 + $0x10] sm:$0xf]
      %v313 = vld [vmem:[%s3 + $0x14] sm:$0xf]
      %v314 = vld [vmem:[%s3 + $0x18] sm:$0xf]
      %v315 = vld [vmem:[%s3 + $0x1c] sm:$0xf]
      %v316 = vld [vmem:[%s3 + $0x20] sm:$0xf]
      %v317 = vld [vmem:[%s3 + $0x24] sm:$0xf]
      %v318 = vld [vmem:[%s3 + $0x28] sm:$0xf]
      %v319 = vld [vmem:[%s3 + $0x2c] sm:$0xf]
      %v320 = vld [vmem:[%s3 + $0x30] sm:$0xf]
      %v321 = vld [vmem:[%s3 + $0x34] sm:$0xf]
      %v322 = vld [vmem:[%s3 + $0x38] sm:$0xf]
      %v323 = vld [vmem:[%s3 + $0x3c] sm:$0xf]
      %v324 = vld [vmem:[%s4] sm:$0x1]
      %v326 = vperm.slane %v324, 0
      %v344 = vunpack.c.l.b16 %v308
      %v345 = vunpack.c.l.b16 %v309
      %v346 = vunpack.c.l.b16 %v310
      %v347 = vunpack.c.l.b16 %v311
      %v348 = vunpack.c.l.b16 %v312
      %v349 = vunpack.c.l.b16 %v313
      %v350 = vunpack.c.l.b16 %v314
      %v351 = vunpack.c.l.b16 %v315
      %v352 = vunpack.c.l.b16 %v316
      %v353 = vunpack.c.l.b16 %v317
      %v354 = vunpack.c.l.b16 %v318
      %v355 = vunpack.c.l.b16 %v319
      %v356 = vunpack.c.l.b16 %v320
      %v357 = vunpack.c.l.b16 %v321
      %v358 = vunpack.c.l.b16 %v322
      %v359 = vunpack.c.l.b16 %v323
      %v360 = vpack.c.b16 %v345, %v344
      %v361 = vpack.c.b16 %v347, %v346
      %v362 = vpack.c.b16 %v349, %v348
      %v363 = vpack.c.b16 %v351, %v350
      %v364 = vpack.c.b16 %v353, %v352
      %v365 = vpack.c.b16 %v355, %v354
      %v366 = vpack.c.b16 %v357, %v356
      %v367 = vpack.c.b16 %v359, %v358
      %376 = vmatpush.bf16.msra.mxu0 %v367
      %377 = vmatpush.bf16.msra.mxu0 %v366
      %378 = vmatpush.bf16.msra.mxu0 %v365
      %379 = vmatpush.bf16.msra.mxu0 %v364
      %380 = vmatpush.bf16.msra.mxu0 %v363
      %381 = vmatpush.bf16.msra.mxu0 %v362
      %382 = vmatpush.bf16.msra.mxu0 %v361
      %383 = vmatpush.bf16.msra.mxu0 %v360
      %384 = vmatmul.bf16.gmra.mxu0 %v300
      %v385 = vpop.f32.mrf.mxu0
      %v386 = vadd.f32 %v326, %v385
      %v387 = vpop.f32.mrf.mxu0
      %v388 = vadd.f32 %v326, %v387
      %389 = vmatmul.bf16.gmra.mxu0 %v301
      %v390 = vpop.f32.mrf.mxu0
      %v391 = vadd.f32 %v326, %v390
      %v392 = vpop.f32.mrf.mxu0
      %v393 = vadd.f32 %v326, %v392
      %394 = vmatmul.bf16.gmra.mxu0 %v302
      %v395 = vpop.f32.mrf.mxu0
      %v396 = vadd.f32 %v326, %v395
      %v397 = vpop.f32.mrf.mxu0
      %v398 = vadd.f32 %v326, %v397
      %399 = vmatmul.bf16.gmra.mxu0 %v303
      %v400 = vpop.f32.mrf.mxu0
      %v401 = vadd.f32 %v326, %v400
      %v402 = vpop.f32.mrf.mxu0
      %v403 = vadd.f32 %v326, %v402
      %404 = vmatmul.bf16.gmra.mxu0 %v304
      %v405 = vpop.f32.mrf.mxu0
      %v406 = vadd.f32 %v326, %v405
      %v407 = vpop.f32.mrf.mxu0
      %v408 = vadd.f32 %v326, %v407
      %409 = vmatmul.bf16.gmra.mxu0 %v305
      %v410 = vpop.f32.mrf.mxu0
      %v411 = vadd.f32 %v326, %v410
      %v412 = vpop.f32.mrf.mxu0
      %v413 = vadd.f32 %v326, %v412
      %414 = vmatmul.bf16.gmra.mxu0 %v306
      %v415 = vpop.f32.mrf.mxu0
      %v416 = vadd.f32 %v326, %v415
      %v417 = vpop.f32.mrf.mxu0
      %v418 = vadd.f32 %v326, %v417
      %419 = vmatmul.bf16.gmra.mxu0 %v307
      %v420 = vpop.f32.mrf.mxu0
      %v421 = vadd.f32 %v326, %v420
      %v422 = vpop.f32.mrf.mxu0
      %v423 = vadd.f32 %v326, %v422
      %424 = vdwg.mxu0
      %v425 = vmul.f32 %v386, %v386
      %v426 = vmul.f32 %v388, %v388
      %v427 = vmul.f32 %v391, %v391
      %v428 = vmul.f32 %v393, %v393
      %v429 = vmul.f32 %v396, %v396
      %v430 = vmul.f32 %v398, %v398
      %v431 = vmul.f32 %v401, %v401
      %v432 = vmul.f32 %v403, %v403
      %v433 = vmul.f32 %v406, %v406
      %v434 = vmul.f32 %v408, %v408
      %v435 = vmul.f32 %v411, %v411
      %v436 = vmul.f32 %v413, %v413
      %v437 = vmul.f32 %v416, %v416
      %v438 = vmul.f32 %v418, %v418
      %v439 = vmul.f32 %v421, %v421
      %v440 = vmul.f32 %v423, %v423
      %441 = vadd.xlane.f32.xlu0 %v425
      %v442 = vpop.xlane.xlu0 %441
      %443 = vadd.xlane.f32.xlu0 %v426
      %v444 = vpop.xlane.xlu0 %443
      %445 = vadd.xlane.f32.xlu0 %v427
      %v446 = vpop.xlane.xlu0 %445
      %447 = vadd.xlane.f32.xlu0 %v428
      %v448 = vpop.xlane.xlu0 %447
      %449 = vadd.xlane.f32.xlu0 %v429
      %v450 = vpop.xlane.xlu0 %449
      %451 = vadd.xlane.f32.xlu0 %v430
      %v452 = vpop.xlane.xlu0 %451
      %453 = vadd.xlane.f32.xlu0 %v431
      %v454 = vpop.xlane.xlu0 %453
      %455 = vadd.xlane.f32.xlu0 %v432
      %v456 = vpop.xlane.xlu0 %455
      %457 = vadd.xlane.f32.xlu0 %v433
      %v458 = vpop.xlane.xlu0 %457
      %459 = vadd.xlane.f32.xlu0 %v434
      %v460 = vpop.xlane.xlu0 %459
      %461 = vadd.xlane.f32.xlu0 %v435
      %v462 = vpop.xlane.xlu0 %461
      %463 = vadd.xlane.f32.xlu0 %v436
      %v464 = vpop.xlane.xlu0 %463
      %465 = vadd.xlane.f32.xlu0 %v437
      %v466 = vpop.xlane.xlu0 %465
      %467 = vadd.xlane.f32.xlu0 %v438
      %v468 = vpop.xlane.xlu0 %467
      %469 = vadd.xlane.f32.xlu0 %v439
      %v470 = vpop.xlane.xlu0 %469
      %471 = vadd.xlane.f32.xlu0 %v440
      %v472 = vpop.xlane.xlu0 %471
      %v473 = vmax.f32 %v442, 1e-24
      %v474 = vmax.f32 %v444, 1e-24
      %v475 = vmax.f32 %v446, 1e-24
      %v476 = vmax.f32 %v448, 1e-24
      %v477 = vmax.f32 %v450, 1e-24
      %v478 = vmax.f32 %v452, 1e-24
      %v479 = vmax.f32 %v454, 1e-24
      %v480 = vmax.f32 %v456, 1e-24
      %v481 = vmax.f32 %v458, 1e-24
      %v482 = vmax.f32 %v460, 1e-24
      %v483 = vmax.f32 %v462, 1e-24
      %v484 = vmax.f32 %v464, 1e-24
      %v485 = vmax.f32 %v466, 1e-24
      %v486 = vmax.f32 %v468, 1e-24
      %v487 = vmax.f32 %v470, 1e-24
      %v488 = vmax.f32 %v472, 1e-24
      %v489 = vrsqrt.pop %v473
      %v490 = vmul.f32 %v489, %v473
      %v491 = vmul.f32 %v490, %v489
      %v492 = vmul.f32 0.5, %v491
      %v493 = vsub.f32 1.5, %v492
      %v494 = vmul.f32 %v489, %v493
      %vm495 = vweird.f32 %v473
      %vm496 = vweird.f32 %v489
      %vm497 = vmor %vm495, %vm496
      %v498 = vsel %vm497, %v489, %v494
      %v499 = vrsqrt.pop %v474
      %v500 = vmul.f32 %v499, %v474
      %v501 = vmul.f32 %v500, %v499
      %v502 = vmul.f32 0.5, %v501
      %v503 = vsub.f32 1.5, %v502
      %v504 = vmul.f32 %v499, %v503
      %vm505 = vweird.f32 %v474
      %vm506 = vweird.f32 %v499
      %vm507 = vmor %vm505, %vm506
      %v508 = vsel %vm507, %v499, %v504
      %v509 = vrsqrt.pop %v475
      %v510 = vmul.f32 %v509, %v475
      %v511 = vmul.f32 %v510, %v509
      %v512 = vmul.f32 0.5, %v511
      %v513 = vsub.f32 1.5, %v512
      %v514 = vmul.f32 %v509, %v513
      %vm515 = vweird.f32 %v475
      %vm516 = vweird.f32 %v509
      %vm517 = vmor %vm515, %vm516
      %v518 = vsel %vm517, %v509, %v514
      %v519 = vrsqrt.pop %v476
      %v520 = vmul.f32 %v519, %v476
      %v521 = vmul.f32 %v520, %v519
      %v522 = vmul.f32 0.5, %v521
      %v523 = vsub.f32 1.5, %v522
      %v524 = vmul.f32 %v519, %v523
      %vm525 = vweird.f32 %v476
      %vm526 = vweird.f32 %v519
      %vm527 = vmor %vm525, %vm526
      %v528 = vsel %vm527, %v519, %v524
      %v529 = vrsqrt.pop %v477
      %v530 = vmul.f32 %v529, %v477
      %v531 = vmul.f32 %v530, %v529
      %v532 = vmul.f32 0.5, %v531
      %v533 = vsub.f32 1.5, %v532
      %v534 = vmul.f32 %v529, %v533
      %vm535 = vweird.f32 %v477
      %vm536 = vweird.f32 %v529
      %vm537 = vmor %vm535, %vm536
      %v538 = vsel %vm537, %v529, %v534
      %v539 = vrsqrt.pop %v478
      %v540 = vmul.f32 %v539, %v478
      %v541 = vmul.f32 %v540, %v539
      %v542 = vmul.f32 0.5, %v541
      %v543 = vsub.f32 1.5, %v542
      %v544 = vmul.f32 %v539, %v543
      %vm545 = vweird.f32 %v478
      %vm546 = vweird.f32 %v539
      %vm547 = vmor %vm545, %vm546
      %v548 = vsel %vm547, %v539, %v544
      %v549 = vrsqrt.pop %v479
      %v550 = vmul.f32 %v549, %v479
      %v551 = vmul.f32 %v550, %v549
      %v552 = vmul.f32 0.5, %v551
      %v553 = vsub.f32 1.5, %v552
      %v554 = vmul.f32 %v549, %v553
      %vm555 = vweird.f32 %v479
      %vm556 = vweird.f32 %v549
      %vm557 = vmor %vm555, %vm556
      %v558 = vsel %vm557, %v549, %v554
      %v559 = vrsqrt.pop %v480
      %v560 = vmul.f32 %v559, %v480
      %v561 = vmul.f32 %v560, %v559
      %v562 = vmul.f32 0.5, %v561
      %v563 = vsub.f32 1.5, %v562
      %v564 = vmul.f32 %v559, %v563
      %vm565 = vweird.f32 %v480
      %vm566 = vweird.f32 %v559
      %vm567 = vmor %vm565, %vm566
      %v568 = vsel %vm567, %v559, %v564
      %v569 = vrsqrt.pop %v481
      %v570 = vmul.f32 %v569, %v481
      %v571 = vmul.f32 %v570, %v569
      %v572 = vmul.f32 0.5, %v571
      %v573 = vsub.f32 1.5, %v572
      %v574 = vmul.f32 %v569, %v573
      %vm575 = vweird.f32 %v481
      %vm576 = vweird.f32 %v569
      %vm577 = vmor %vm575, %vm576
      %v578 = vsel %vm577, %v569, %v574
      %v579 = vrsqrt.pop %v482
      %v580 = vmul.f32 %v579, %v482
      %v581 = vmul.f32 %v580, %v579
      %v582 = vmul.f32 0.5, %v581
      %v583 = vsub.f32 1.5, %v582
      %v584 = vmul.f32 %v579, %v583
      %vm585 = vweird.f32 %v482
      %vm586 = vweird.f32 %v579
      %vm587 = vmor %vm585, %vm586
      %v588 = vsel %vm587, %v579, %v584
      %v589 = vrsqrt.pop %v483
      %v590 = vmul.f32 %v589, %v483
      %v591 = vmul.f32 %v590, %v589
      %v592 = vmul.f32 0.5, %v591
      %v593 = vsub.f32 1.5, %v592
      %v594 = vmul.f32 %v589, %v593
      %vm595 = vweird.f32 %v483
      %vm596 = vweird.f32 %v589
      %vm597 = vmor %vm595, %vm596
      %v598 = vsel %vm597, %v589, %v594
      %v599 = vrsqrt.pop %v484
      %v600 = vmul.f32 %v599, %v484
      %v601 = vmul.f32 %v600, %v599
      %v602 = vmul.f32 0.5, %v601
      %v603 = vsub.f32 1.5, %v602
      %v604 = vmul.f32 %v599, %v603
      %vm605 = vweird.f32 %v484
      %vm606 = vweird.f32 %v599
      %vm607 = vmor %vm605, %vm606
      %v608 = vsel %vm607, %v599, %v604
      %v609 = vrsqrt.pop %v485
      %v610 = vmul.f32 %v609, %v485
      %v611 = vmul.f32 %v610, %v609
      %v612 = vmul.f32 0.5, %v611
      %v613 = vsub.f32 1.5, %v612
      %v614 = vmul.f32 %v609, %v613
      %vm615 = vweird.f32 %v485
      %vm616 = vweird.f32 %v609
      %vm617 = vmor %vm615, %vm616
      %v618 = vsel %vm617, %v609, %v614
      %v619 = vrsqrt.pop %v486
      %v620 = vmul.f32 %v619, %v486
      %v621 = vmul.f32 %v620, %v619
      %v622 = vmul.f32 0.5, %v621
      %v623 = vsub.f32 1.5, %v622
      %v624 = vmul.f32 %v619, %v623
      %vm625 = vweird.f32 %v486
      %vm626 = vweird.f32 %v619
      %vm627 = vmor %vm625, %vm626
      %v628 = vsel %vm627, %v619, %v624
      %v629 = vrsqrt.pop %v487
      %v630 = vmul.f32 %v629, %v487
      %v631 = vmul.f32 %v630, %v629
      %v632 = vmul.f32 0.5, %v631
      %v633 = vsub.f32 1.5, %v632
      %v634 = vmul.f32 %v629, %v633
      %vm635 = vweird.f32 %v487
      %vm636 = vweird.f32 %v629
      %vm637 = vmor %vm635, %vm636
      %v638 = vsel %vm637, %v629, %v634
      %v639 = vrsqrt.pop %v488
      %v640 = vmul.f32 %v639, %v488
      %v641 = vmul.f32 %v640, %v639
      %v642 = vmul.f32 0.5, %v641
      %v643 = vsub.f32 1.5, %v642
      %v644 = vmul.f32 %v639, %v643
      %vm645 = vweird.f32 %v488
      %vm646 = vweird.f32 %v639
      %vm647 = vmor %vm645, %vm646
      %v648 = vsel %vm647, %v639, %v644
      %v649 = vmul.f32 %v386, %v498
      %v650 = vmul.f32 %v388, %v508
      %v651 = vmul.f32 %v391, %v518
      %v652 = vmul.f32 %v393, %v528
      %v653 = vmul.f32 %v396, %v538
      %v654 = vmul.f32 %v398, %v548
      %v655 = vmul.f32 %v401, %v558
      %v656 = vmul.f32 %v403, %v568
      %v657 = vmul.f32 %v406, %v578
      %v658 = vmul.f32 %v408, %v588
      %v659 = vmul.f32 %v411, %v598
      %v660 = vmul.f32 %v413, %v608
      %v661 = vmul.f32 %v416, %v618
      %v662 = vmul.f32 %v418, %v628
      %v663 = vmul.f32 %v421, %v638
      %v664 = vmul.f32 %v423, %v648
      %665 = vst [vmem:[%s226] sm:$0xff] %v649
      %666 = vst [vmem:[%s226 + $0x8] sm:$0xff] %v650
      %667 = vst [vmem:[%s226 + $0x10] sm:$0xff] %v651
      %668 = vst [vmem:[%s226 + $0x18] sm:$0xff] %v652
      %669 = vst [vmem:[%s226 + $0x20] sm:$0xff] %v653
      %670 = vst [vmem:[%s226 + $0x28] sm:$0xff] %v654
      %671 = vst [vmem:[%s226 + $0x30] sm:$0xff] %v655
      %672 = vst [vmem:[%s226 + $0x38] sm:$0xff] %v656
      %673 = vst [vmem:[%s226 + $0x40] sm:$0xff] %v657
      %674 = vst [vmem:[%s226 + $0x48] sm:$0xff] %v658
      %675 = vst [vmem:[%s226 + $0x50] sm:$0xff] %v659
      %676 = vst [vmem:[%s226 + $0x58] sm:$0xff] %v660
      %677 = vst [vmem:[%s226 + $0x60] sm:$0xff] %v661
      %678 = vst [vmem:[%s226 + $0x68] sm:$0xff] %v662
      %679 = vst [vmem:[%s226 + $0x70] sm:$0xff] %v663
      %680 = vst [vmem:[%s226 + $0x78] sm:$0xff] %v664
      %s681 = smul.u32 16, %s16
      %p682 = scmp.lt.s32.totalorder %s681, 31
      %s683 = scalar_select %p682, %s681, 31
      %s684 = smul.addr %s683, 8
      %s685 = scalar_lea.vmem %s5, %s684
      // Predicated region
      $region41: #{projection_head.3} parent=39 // pred_check
        %p686 = pneg %p144
      $region42: #{projection_head.3} parent=39 // pred_check_branch
        %688 = sbr.rel (%p686) target = $region44
      $region43: #{projection_head.3} parent=39 // pred_region
        %s689 = smul.u32 16, %s16
      $region44: #{projection_head.3} parent=39 // pred_fallthru
        _
    $region40: #{projection_head.3} parent=5 // pred_fallthru
      _
    %p690 = scmp.le.s32.totalorder 2, %s11
    // Predicated region
    $region45: #{projection_head.3} parent=5 // pred_check
      %p691 = pneg %p690
    $region46: #{projection_head.3} parent=5 // pred_check_branch
      %693 = sbr.rel (%p691) target = $region48
    $region47: #{projection_head.3} parent=5 // pred_region
      %s694 = ssub.s32 %s11, 2
      // Predicated region
      $region49: #{projection_head.3} parent=47 // pred_check
        %p695 = pneg %p150
      $region50: #{projection_head.3} parent=47 // pred_check_branch
        %697 = sbr.rel (%p695) target = $region52
      $region51: #{projection_head.3} parent=47 // pred_region
        %s698 = smul.u32 16, %s17
        %p699 = scmp.lt.s32.totalorder %s698, 31
        %s700 = scalar_select %p699, %s698, 31
        %s701 = smul.addr %s700, 8
        %s702 = scalar_lea.vmem %s5, %s701
      $region52: #{projection_head.3} parent=47 // pred_fallthru
        _
    $region48: #{projection_head.3} parent=5 // pred_fallthru
      _
  $region6: #{projection_head.3} parent=0 // loop_footer
    %s15 = sadd.s32 1, %s11
  $region7: #{projection_head.3} parent=0 // loop_footer_branch
    %10 = sbr.rel target = $region3
  $region8: #{projection_head.3} parent=0 // loop_exit
    _

// kernel: projection_head.2
$region0: #{projection_head.2}
  #allocation0 [shape = 'u32[]', space=smem, size = 0x4, offset = 0x4, fixed_abs, tag = 'smem constant byte address 0x4 - core index']
  #allocation1 [shape = 'u32[72,128]{1,0:T(1,128)}', space=vmem, size = 0x9000, scoped, tag = 'internal scratch']
  %s0 = inlined_call_operand.vmem [shape: f32[256,128], index: 0, kind: input, shape index: {}]
  %s1 = inlined_call_operand.vmem [shape: f32[1,128], index: 1, kind: input, shape index: {}]
  %s2 = inlined_call_operand.vmem [shape: f32[1,128], index: 2, kind: input, shape index: {}]
  %s3 = inlined_call_operand.vmem [shape: bf16[128,128], index: 3, kind: input, shape index: {}]
  %s4 = inlined_call_operand.vmem [shape: f32[1,128], index: 4, kind: input, shape index: {}]
  %s5 = inlined_call_operand.vmem [shape: f32[256,128], index: 5, kind: output, shape index: {0}]
  %s6 = inlined_call_operand.vmem [shape: f32[2,2,128], index: 6, kind: output, shape index: {1}]
  %7 = xla_tuple %s5, %s6
  %s8 = sld [smem:[#allocation0]]
  $region61: #{projection_head.2} parent=0
    _
  %s10 = ssub.s32 1, %s8
  %s11 = scalar_select 0, %s10, %s8
  loop: start=0, step=1, limit=4
  $region2: #{projection_head.2} parent=0 // loop_pre_header
    _
  $region3: #{projection_head.2} parent=0 // loop_header
    %s13 = sphi 0, %s17
    %p14 = scmp.ge.s32.totalorder %s13, 4
    %s23 = sphi 0, %s25
    %s26 = sphi 0, %s23
    %s27 = sphi 0, %s26
    %s43 = sphi 0, %s27
    %s47 = sphi 0, %s47
    %s49 = sphi 0, %s47
    %s50 = sphi 0, %s49
    %s64 = sphi 0, %s50
    %s68 = sphi 0, %s68
    %s70 = sphi 0, %s68
    %s71 = sphi 0, %s70
    %s85 = sphi 0, %s71
    %s89 = sphi 0, %s89
    %s91 = sphi 0, %s89
    %s92 = sphi 0, %s91
    %s106 = sphi 0, %s92
    %s110 = sphi 0, %s110
    %s112 = sphi 0, %s110
    %s113 = sphi 0, %s112
    %s127 = sphi 0, %s113
    %s133 = sphi 0, %s135
    %s136 = sphi 0, %s133
    %s137 = sphi 0, %s136
    %s153 = sphi 0, %s137
    %s159 = sphi 0, %s161
    %s162 = sphi 0, %s159
    %s163 = sphi 0, %s162
    %s179 = sphi 0, %s163
  $region4: #{projection_head.2} parent=0 // loop_header_branch
    %16 = sbr.rel (%p14) target = $region8
  $region5: #{projection_head.2} parent=0 // loop_body
    %s18 = ssub.s32 %s13, 1
    %s19 = ssub.s32 %s13, 2
    %s20 = sadd.s32 %s13, 1
    %s21 = ssub.s32 %s13, %s20
    %p22 = scmp.eq.s32.totalorder %s21, 0
    %s24 = sadd.s32 %s23, 1
    %s25 = scalar_select %p22, %s23, %s24
    %p28 = pneg %p22
    %p29 = scmp.eq.s32.totalorder %s13, 1
    %p30 = por %p28, %p29
    %p31 = scmp.ne.s32.totalorder %s23, %s26
    %p32 = scmp.eq.s32.totalorder %s13, 0
    %p33 = por %p31, %p32
    %p34 = scmp.ne.s32.totalorder %s23, %s26
    %p35 = scmp.eq.s32.totalorder %s18, 1
    %p36 = por %p34, %p35
    %p37 = scmp.ne.s32.totalorder %s26, %s27
    %p38 = scmp.eq.s32.totalorder %s18, 0
    %p39 = por %p37, %p38
    %p40 = scmp.ne.s32.totalorder %s26, %s27
    %p41 = scmp.eq.s32.totalorder %s19, 1
    %p42 = por %p40, %p41
    %p44 = scmp.ne.s32.totalorder %s27, %s43
    %p45 = scmp.eq.s32.totalorder %s19, 0
    %p46 = por %p44, %p45
    %s48 = sadd.s32 %s47, 1
    %p51 = scmp.eq.s32.totalorder %s13, 1
    %p52 = scmp.ne.s32.totalorder %s47, %s49
    %p53 = scmp.eq.s32.totalorder %s13, 0
    %p54 = por %p52, %p53
    %p55 = scmp.ne.s32.totalorder %s47, %s49
    %p56 = scmp.eq.s32.totalorder %s18, 1
    %p57 = por %p55, %p56
    %p58 = scmp.ne.s32.totalorder %s49, %s50
    %p59 = scmp.eq.s32.totalorder %s18, 0
    %p60 = por %p58, %p59
    %p61 = scmp.ne.s32.totalorder %s49, %s50
    %p62 = scmp.eq.s32.totalorder %s19, 1
    %p63 = por %p61, %p62
    %p65 = scmp.ne.s32.totalorder %s50, %s64
    %p66 = scmp.eq.s32.totalorder %s19, 0
    %p67 = por %p65, %p66
    %s69 = sadd.s32 %s68, 1
    %p72 = scmp.eq.s32.totalorder %s13, 1
    %p73 = scmp.ne.s32.totalorder %s68, %s70
    %p74 = scmp.eq.s32.totalorder %s13, 0
    %p75 = por %p73, %p74
    %p76 = scmp.ne.s32.totalorder %s68, %s70
    %p77 = scmp.eq.s32.totalorder %s18, 1
    %p78 = por %p76, %p77
    %p79 = scmp.ne.s32.totalorder %s70, %s71
    %p80 = scmp.eq.s32.totalorder %s18, 0
    %p81 = por %p79, %p80
    %p82 = scmp.ne.s32.totalorder %s70, %s71
    %p83 = scmp.eq.s32.totalorder %s19, 1
    %p84 = por %p82, %p83
    %p86 = scmp.ne.s32.totalorder %s71, %s85
    %p87 = scmp.eq.s32.totalorder %s19, 0
    %p88 = por %p86, %p87
    %s90 = sadd.s32 %s89, 1
    %p93 = scmp.eq.s32.totalorder %s13, 1
    %p94 = scmp.ne.s32.totalorder %s89, %s91
    %p95 = scmp.eq.s32.totalorder %s13, 0
    %p96 = por %p94, %p95
    %p97 = scmp.ne.s32.totalorder %s89, %s91
    %p98 = scmp.eq.s32.totalorder %s18, 1
    %p99 = por %p97, %p98
    %p100 = scmp.ne.s32.totalorder %s91, %s92
    %p101 = scmp.eq.s32.totalorder %s18, 0
    %p102 = por %p100, %p101
    %p103 = scmp.ne.s32.totalorder %s91, %s92
    %p104 = scmp.eq.s32.totalorder %s19, 1
    %p105 = por %p103, %p104
    %p107 = scmp.ne.s32.totalorder %s92, %s106
    %p108 = scmp.eq.s32.totalorder %s19, 0
    %p109 = por %p107, %p108
    %s111 = sadd.s32 %s110, 1
    %p114 = scmp.eq.s32.totalorder %s13, 1
    %p115 = scmp.ne.s32.totalorder %s110, %s112
    %p116 = scmp.eq.s32.totalorder %s13, 0
    %p117 = por %p115, %p116
    %p118 = scmp.ne.s32.totalorder %s110, %s112
    %p119 = scmp.eq.s32.totalorder %s18, 1
    %p120 = por %p118, %p119
    %p121 = scmp.ne.s32.totalorder %s112, %s113
    %p122 = scmp.eq.s32.totalorder %s18, 0
    %p123 = por %p121, %p122
    %p124 = scmp.ne.s32.totalorder %s112, %s113
    %p125 = scmp.eq.s32.totalorder %s19, 1
    %p126 = por %p124, %p125
    %p128 = scmp.ne.s32.totalorder %s113, %s127
    %p129 = scmp.eq.s32.totalorder %s19, 0
    %p130 = por %p128, %p129
    %s131 = ssub.s32 %s13, %s20
    %p132 = scmp.eq.s32.totalorder %s131, 0
    %s134 = sadd.s32 %s133, 1
    %s135 = scalar_select %p132, %s133, %s134
    %p138 = pneg %p132
    %p139 = scmp.eq.s32.totalorder %s13, 1
    %p140 = por %p138, %p139
    %p141 = scmp.ne.s32.totalorder %s133, %s136
    %p142 = scmp.eq.s32.totalorder %s13, 0
    %p143 = por %p141, %p142
    %p144 = scmp.ne.s32.totalorder %s133, %s136
    %p145 = scmp.eq.s32.totalorder %s18, 1
    %p146 = por %p144, %p145
    %p147 = scmp.ne.s32.totalorder %s136, %s137
    %p148 = scmp.eq.s32.totalorder %s18, 0
    %p149 = por %p147, %p148
    %p150 = scmp.ne.s32.totalorder %s136, %s137
    %p151 = scmp.eq.s32.totalorder %s19, 1
    %p152 = por %p150, %p151
    %p154 = scmp.ne.s32.totalorder %s137, %s153
    %p155 = scmp.eq.s32.totalorder %s19, 0
    %p156 = por %p154, %p155
    %s157 = ssub.s32 %s13, %s20
    %p158 = scmp.eq.s32.totalorder %s157, 0
    %s160 = sadd.s32 %s159, 1
    %s161 = scalar_select %p158, %s159, %s160
    %p164 = pneg %p158
    %p165 = scmp.eq.s32.totalorder %s13, 1
    %p166 = por %p164, %p165
    %p167 = scmp.ne.s32.totalorder %s159, %s162
    %p168 = scmp.eq.s32.totalorder %s13, 0
    %p169 = por %p167, %p168
    %p170 = scmp.ne.s32.totalorder %s159, %s162
    %p171 = scmp.eq.s32.totalorder %s18, 1
    %p172 = por %p170, %p171
    %p173 = scmp.ne.s32.totalorder %s162, %s163
    %p174 = scmp.eq.s32.totalorder %s18, 0
    %p175 = por %p173, %p174
    %p176 = scmp.ne.s32.totalorder %s162, %s163
    %p177 = scmp.eq.s32.totalorder %s19, 1
    %p178 = por %p176, %p177
    %p180 = scmp.ne.s32.totalorder %s163, %s179
    %p181 = scmp.eq.s32.totalorder %s19, 0
    %p182 = por %p180, %p181
    %p183 = scmp.le.s32.totalorder 1, %s13
    %p184 = scmp.lt.s32.totalorder %s13, 3
    %p185 = pnand %p183, %p184
    %p186 = pneg %p185
    // Predicated region
    $region9: #{projection_head.2} parent=5 // pred_check
      _
    $region10: #{projection_head.2} parent=5 // pred_check_branch
      %188 = sbr.rel (%p185) target = $region12
    $region11: #{projection_head.2} parent=5 // pred_region
      %s189 = ssub.s32 %s13, 1
      // Predicated region
      $region13: #{projection_head.2} parent=11 // pred_check
        %p190 = pneg %p60
      $region14: #{projection_head.2} parent=11 // pred_check_branch
        %192 = sbr.rel (%p190) target = $region16
      $region15: #{projection_head.2} parent=11 // pred_region
        _
      $region16: #{projection_head.2} parent=11 // pred_fallthru
        _
      // Predicated region
      $region17: #{projection_head.2} parent=11 // pred_check
        %p193 = pneg %p81
      $region18: #{projection_head.2} parent=11 // pred_check_branch
        %195 = sbr.rel (%p193) target = $region20
      $region19: #{projection_head.2} parent=11 // pred_region
        _
      $region20: #{projection_head.2} parent=11 // pred_fallthru
        _
      // Predicated region
      $region21: #{projection_head.2} parent=11 // pred_check
        %p196 = pneg %p102
      $region22: #{projection_head.2} parent=11 // pred_check_branch
        %198 = sbr.rel (%p196) target = $region24
      $region23: #{projection_head.2} parent=11 // pred_region
        _
      $region24: #{projection_head.2} parent=11 // pred_fallthru
        _
      // Predicated region
      $region25: #{projection_head.2} parent=11 // pred_check
        %p199 = pneg %p123
      $region26: #{projection_head.2} parent=11 // pred_check_branch
        %201 = sbr.rel (%p199) target = $region28
      $region27: #{projection_head.2} parent=11 // pred_region
        _
      $region28: #{projection_head.2} parent=11 // pred_fallthru
        _
    $region12: #{projection_head.2} parent=5 // pred_fallthru
      _
    %p202 = scmp.lt.s32.totalorder %s13, 2
    // Predicated region
    $region29: #{projection_head.2} parent=5 // pred_check
      %p203 = pneg %p202
    $region30: #{projection_head.2} parent=5 // pred_check_branch
      %205 = sbr.rel (%p203) target = $region32
    $region31: #{projection_head.2} parent=5 // pred_region
      // Predicated region
      $region33: #{projection_head.2} parent=31 // pred_check
        %p206 = pneg %p33
      $region34: #{projection_head.2} parent=31 // pred_check_branch
        %208 = sbr.rel (%p206) target = $region36
      $region35: #{projection_head.2} parent=31 // pred_region
        %s209 = smul.u32 16, %s13
        %p210 = scmp.lt.s32.totalorder %s209, 31
        %s211 = scalar_select %p210, %s209, 31
        %s212 = smul.addr %s211, 8
        %s213 = scalar_lea.vmem %s0, %s212
        %s214 = smul.u32 16, %s13
      $region36: #{projection_head.2} parent=31 // pred_fallthru
        _
    $region32: #{projection_head.2} parent=5 // pred_fallthru
      _
    %p215 = scmp.le.s32.totalorder 1, %s13
    %p216 = scmp.lt.s32.totalorder %s13, 3
    %p217 = pnand %p215, %p216
    %p218 = pneg %p217
    // Predicated region
    $region37: #{projection_head.2} parent=5 // pred_check
      _
    $region38: #{projection_head.2} parent=5 // pred_check_branch
      %220 = sbr.rel (%p217) target = $region40
    $region39: #{projection_head.2} parent=5 // pred_region
      %s221 = ssub.s32 %s13, 1
      %s222 = smul.u32 16, %s18
      %p223 = scmp.lt.s32.totalorder %s222, 31
      %s224 = scalar_select %p223, %s222, 31
      %s225 = smul.addr %s224, 8
      %s226 = scalar_lea.vmem %s0, %s225
      %p227 = pneg %p39
      %p228 = pneg %p36
      %p229 = pneg %p60
      %p230 = pneg %p57
      %p231 = pneg %p81
      %p232 = pneg %p78
      %p233 = pneg %p102
      %p234 = pneg %p99
      %p235 = pneg %p123
      %p236 = pneg %p120
      %p237 = pneg %p149
      %p238 = pneg %p146
      %s239 = smul.u32 16, %s18
      %p240 = scmp.lt.s32.totalorder %s239, 31
      %s241 = scalar_select %p240, %s239, 31
      %s242 = smul.addr %s241, 8
      %s243 = scalar_lea.vmem %s5, %s242
      %p244 = pneg %p175
      %p245 = pneg %p172
      %p246 = scmp.lt.s32.totalorder %s18, 1
      %s247 = scalar_select %p246, %s18, 1
      %s248 = smul.addr %s247, 2
      %s249 = scalar_lea.vmem %s6, %s248
      %s250 = smul.u32 16, %s18
      %p251 = scmp.lt.s32.totalorder %s250, 31
      %s252 = scalar_select %p251, %s250, 31
      %s253 = smul.addr %s252, 8
      %s254 = scalar_lea.vmem %s0, %s253
      %s255 = smul.u32 16, %s18
      %s256 = smul.u32 16, %s18
      %p257 = scmp.lt.s32.totalorder %s256, 31
      %s258 = scalar_select %p257, %s256, 31
      %s259 = smul.addr %s258, 8
      %s260 = scalar_lea.vmem %s5, %s259
      %s261 = smul.u32 16, %s18
      %p262 = scmp.lt.s32.totalorder %s18, 1
      %s263 = scalar_select %p262, %s18, 1
      %s264 = smul.addr %s263, 2
      %s265 = scalar_lea.vmem %s6, %s264
      %v266 = vld [vmem:[%s254] sm:$0xff]
      %v267 = vld [vmem:[%s254 + $0x8] sm:$0xff]
      %v268 = vld [vmem:[%s254 + $0x10] sm:$0xff]
      %v269 = vld [vmem:[%s254 + $0x18] sm:$0xff]
      %v270 = vld [vmem:[%s254 + $0x20] sm:$0xff]
      %v271 = vld [vmem:[%s254 + $0x28] sm:$0xff]
      %v272 = vld [vmem:[%s254 + $0x30] sm:$0xff]
      %v273 = vld [vmem:[%s254 + $0x38] sm:$0xff]
      %v274 = vld [vmem:[%s254 + $0x40] sm:$0xff]
      %v275 = vld [vmem:[%s254 + $0x48] sm:$0xff]
      %v276 = vld [vmem:[%s254 + $0x50] sm:$0xff]
      %v277 = vld [vmem:[%s254 + $0x58] sm:$0xff]
      %v278 = vld [vmem:[%s254 + $0x60] sm:$0xff]
      %v279 = vld [vmem:[%s254 + $0x68] sm:$0xff]
      %v280 = vld [vmem:[%s254 + $0x70] sm:$0xff]
      %v281 = vld [vmem:[%s254 + $0x78] sm:$0xff]
      %282 = vadd.xlane.f32.xlu0 %v266
      %v283 = vpop.xlane.xlu0 %282
      %284 = vadd.xlane.f32.xlu0 %v267
      %v285 = vpop.xlane.xlu0 %284
      %286 = vadd.xlane.f32.xlu0 %v268
      %v287 = vpop.xlane.xlu0 %286
      %288 = vadd.xlane.f32.xlu0 %v269
      %v289 = vpop.xlane.xlu0 %288
      %290 = vadd.xlane.f32.xlu0 %v270
      %v291 = vpop.xlane.xlu0 %290
      %292 = vadd.xlane.f32.xlu0 %v271
      %v293 = vpop.xlane.xlu0 %292
      %294 = vadd.xlane.f32.xlu0 %v272
      %v295 = vpop.xlane.xlu0 %294
      %296 = vadd.xlane.f32.xlu0 %v273
      %v297 = vpop.xlane.xlu0 %296
      %298 = vadd.xlane.f32.xlu0 %v274
      %v299 = vpop.xlane.xlu0 %298
      %300 = vadd.xlane.f32.xlu0 %v275
      %v301 = vpop.xlane.xlu0 %300
      %302 = vadd.xlane.f32.xlu0 %v276
      %v303 = vpop.xlane.xlu0 %302
      %304 = vadd.xlane.f32.xlu0 %v277
      %v305 = vpop.xlane.xlu0 %304
      %306 = vadd.xlane.f32.xlu0 %v278
      %v307 = vpop.xlane.xlu0 %306
      %308 = vadd.xlane.f32.xlu0 %v279
      %v309 = vpop.xlane.xlu0 %308
      %310 = vadd.xlane.f32.xlu0 %v280
      %v311 = vpop.xlane.xlu0 %310
      %312 = vadd.xlane.f32.xlu0 %v281
      %v313 = vpop.xlane.xlu0 %312
      %v314 = vmul.f32 %v283, 0.025
      %v315 = vmul.f32 %v285, 0.025
      %v316 = vmul.f32 %v287, 0.025
      %v317 = vmul.f32 %v289, 0.025
      %v318 = vmul.f32 %v291, 0.025
      %v319 = vmul.f32 %v293, 0.025
      %v320 = vmul.f32 %v295, 0.025
      %v321 = vmul.f32 %v297, 0.025
      %v322 = vmul.f32 %v299, 0.025
      %v323 = vmul.f32 %v301, 0.025
      %v324 = vmul.f32 %v303, 0.025
      %v325 = vmul.f32 %v305, 0.025
      %v326 = vmul.f32 %v307, 0.025
      %v327 = vmul.f32 %v309, 0.025
      %v328 = vmul.f32 %v311, 0.025
      %v329 = vmul.f32 %v313, 0.025
      %v330 = vlaneseq
      %v331 = vand.u32 %v330, 127
      %vm332 = vcmp.lt.s32.totalorder %v331, 40
      %v333 = vsub.f32 %v266, %v314
      %v334 = vsub.f32 %v267, %v315
      %v335 = vsub.f32 %v268, %v316
      %v336 = vsub.f32 %v269, %v317
      %v337 = vsub.f32 %v270, %v318
      %v338 = vsub.f32 %v271, %v319
      %v339 = vsub.f32 %v272, %v320
      %v340 = vsub.f32 %v273, %v321
      %v341 = vsub.f32 %v274, %v322
      %v342 = vsub.f32 %v275, %v323
      %v343 = vsub.f32 %v276, %v324
      %v344 = vsub.f32 %v277, %v325
      %v345 = vsub.f32 %v278, %v326
      %v346 = vsub.f32 %v279, %v327
      %v347 = vsub.f32 %v280, %v328
      %v348 = vsub.f32 %v281, %v329
      %v349 = vsel %vm332, 1, 0
      %vm350 = vcmp.eq.s32.totalorder %v349, 1
      %v351 = vsel %vm350, %v333, 0.0
      %v352 = vsel %vm350, %v334, 0.0
      %v353 = vsel %vm350, %v335, 0.0
      %v354 = vsel %vm350, %v336, 0.0
      %v355 = vsel %vm350, %v337, 0.0
      %v356 = vsel %vm350, %v338, 0.0
      %v357 = vsel %vm350, %v339, 0.0
      %v358 = vsel %vm350, %v340, 0.0
      %v359 = vsel %vm350, %v341, 0.0
      %v360 = vsel %vm350, %v342, 0.0
      %v361 = vsel %vm350, %v343, 0.0
      %v362 = vsel %vm350, %v344, 0.0
      %v363 = vsel %vm350, %v345, 0.0
      %v364 = vsel %vm350, %v346, 0.0
      %v365 = vsel %vm350, %v347, 0.0
      %v366 = vsel %vm350, %v348, 0.0
      %v367 = vmul.f32 %v351, %v351
      %v368 = vmul.f32 %v352, %v352
      %v369 = vmul.f32 %v353, %v353
      %v370 = vmul.f32 %v354, %v354
      %v371 = vmul.f32 %v355, %v355
      %v372 = vmul.f32 %v356, %v356
      %v373 = vmul.f32 %v357, %v357
      %v374 = vmul.f32 %v358, %v358
      %v375 = vmul.f32 %v359, %v359
      %v376 = vmul.f32 %v360, %v360
      %v377 = vmul.f32 %v361, %v361
      %v378 = vmul.f32 %v362, %v362
      %v379 = vmul.f32 %v363, %v363
      %v380 = vmul.f32 %v364, %v364
      %v381 = vmul.f32 %v365, %v365
      %v382 = vmul.f32 %v366, %v366
      %383 = vadd.xlane.f32.xlu0 %v367
      %v384 = vpop.xlane.xlu0 %383
      %385 = vadd.xlane.f32.xlu0 %v368
      %v386 = vpop.xlane.xlu0 %385
      %387 = vadd.xlane.f32.xlu0 %v369
      %v388 = vpop.xlane.xlu0 %387
      %389 = vadd.xlane.f32.xlu0 %v370
      %v390 = vpop.xlane.xlu0 %389
      %391 = vadd.xlane.f32.xlu0 %v371
      %v392 = vpop.xlane.xlu0 %391
      %393 = vadd.xlane.f32.xlu0 %v372
      %v394 = vpop.xlane.xlu0 %393
      %395 = vadd.xlane.f32.xlu0 %v373
      %v396 = vpop.xlane.xlu0 %395
      %397 = vadd.xlane.f32.xlu0 %v374
      %v398 = vpop.xlane.xlu0 %397
      %399 = vadd.xlane.f32.xlu0 %v375
      %v400 = vpop.xlane.xlu0 %399
      %401 = vadd.xlane.f32.xlu0 %v376
      %v402 = vpop.xlane.xlu0 %401
      %403 = vadd.xlane.f32.xlu0 %v377
      %v404 = vpop.xlane.xlu0 %403
      %405 = vadd.xlane.f32.xlu0 %v378
      %v406 = vpop.xlane.xlu0 %405
      %407 = vadd.xlane.f32.xlu0 %v379
      %v408 = vpop.xlane.xlu0 %407
      %409 = vadd.xlane.f32.xlu0 %v380
      %v410 = vpop.xlane.xlu0 %409
      %411 = vadd.xlane.f32.xlu0 %v381
      %v412 = vpop.xlane.xlu0 %411
      %413 = vadd.xlane.f32.xlu0 %v382
      %v414 = vpop.xlane.xlu0 %413
      %v415 = vmul.f32 %v384, 0.025
      %v416 = vmul.f32 %v386, 0.025
      %v417 = vmul.f32 %v388, 0.025
      %v418 = vmul.f32 %v390, 0.025
      %v419 = vmul.f32 %v392, 0.025
      %v420 = vmul.f32 %v394, 0.025
      %v421 = vmul.f32 %v396, 0.025
      %v422 = vmul.f32 %v398, 0.025
      %v423 = vmul.f32 %v400, 0.025
      %v424 = vmul.f32 %v402, 0.025
      %v425 = vmul.f32 %v404, 0.025
      %v426 = vmul.f32 %v406, 0.025
      %v427 = vmul.f32 %v408, 0.025
      %v428 = vmul.f32 %v410, 0.025
      %v429 = vmul.f32 %v412, 0.025
      %v430 = vmul.f32 %v414, 0.025
      %v431 = vadd.f32 %v415, 1e-05
      %v432 = vadd.f32 %v416, 1e-05
      %v433 = vadd.f32 %v417, 1e-05
      %v434 = vadd.f32 %v418, 1e-05
      %v435 = vadd.f32 %v419, 1e-05
      %v436 = vadd.f32 %v420, 1e-05
      %v437 = vadd.f32 %v421, 1e-05
      %v438 = vadd.f32 %v422, 1e-05
      %v439 = vadd.f32 %v423, 1e-05
      %v440 = vadd.f32 %v424, 1e-05
      %v441 = vadd.f32 %v425, 1e-05
      %v442 = vadd.f32 %v426, 1e-05
      %v443 = vadd.f32 %v427, 1e-05
      %v444 = vadd.f32 %v428, 1e-05
      %v445 = vadd.f32 %v429, 1e-05
      %v446 = vadd.f32 %v430, 1e-05
      %v447 = vrsqrt.pop %v431
      %v448 = vmul.f32 %v447, %v431
      %v449 = vmul.f32 %v448, %v447
      %v450 = vmul.f32 0.5, %v449
      %v451 = vsub.f32 1.5, %v450
      %v452 = vmul.f32 %v447, %v451
      %vm453 = vweird.f32 %v431
      %vm454 = vweird.f32 %v447
      %vm455 = vmor %vm453, %vm454
      %v456 = vsel %vm455, %v447, %v452
      %v457 = vrsqrt.pop %v432
      %v458 = vmul.f32 %v457, %v432
      %v459 = vmul.f32 %v458, %v457
      %v460 = vmul.f32 0.5, %v459
      %v461 = vsub.f32 1.5, %v460
      %v462 = vmul.f32 %v457, %v461
      %vm463 = vweird.f32 %v432
      %vm464 = vweird.f32 %v457
      %vm465 = vmor %vm463, %vm464
      %v466 = vsel %vm465, %v457, %v462
      %v467 = vrsqrt.pop %v433
      %v468 = vmul.f32 %v467, %v433
      %v469 = vmul.f32 %v468, %v467
      %v470 = vmul.f32 0.5, %v469
      %v471 = vsub.f32 1.5, %v470
      %v472 = vmul.f32 %v467, %v471
      %vm473 = vweird.f32 %v433
      %vm474 = vweird.f32 %v467
      %vm475 = vmor %vm473, %vm474
      %v476 = vsel %vm475, %v467, %v472
      %v477 = vrsqrt.pop %v434
      %v478 = vmul.f32 %v477, %v434
      %v479 = vmul.f32 %v478, %v477
      %v480 = vmul.f32 0.5, %v479
      %v481 = vsub.f32 1.5, %v480
      %v482 = vmul.f32 %v477, %v481
      %vm483 = vweird.f32 %v434
      %vm484 = vweird.f32 %v477
      %vm485 = vmor %vm483, %vm484
      %v486 = vsel %vm485, %v477, %v482
      %v487 = vrsqrt.pop %v435
      %v488 = vmul.f32 %v487, %v435
      %v489 = vmul.f32 %v488, %v487
      %v490 = vmul.f32 0.5, %v489
      %v491 = vsub.f32 1.5, %v490
      %v492 = vmul.f32 %v487, %v491
      %vm493 = vweird.f32 %v435
      %vm494 = vweird.f32 %v487
      %vm495 = vmor %vm493, %vm494
      %v496 = vsel %vm495, %v487, %v492
      %v497 = vrsqrt.pop %v436
      %v498 = vmul.f32 %v497, %v436
      %v499 = vmul.f32 %v498, %v497
      %v500 = vmul.f32 0.5, %v499
      %v501 = vsub.f32 1.5, %v500
      %v502 = vmul.f32 %v497, %v501
      %vm503 = vweird.f32 %v436
      %vm504 = vweird.f32 %v497
      %vm505 = vmor %vm503, %vm504
      %v506 = vsel %vm505, %v497, %v502
      %v507 = vrsqrt.pop %v437
      %v508 = vmul.f32 %v507, %v437
      %v509 = vmul.f32 %v508, %v507
      %v510 = vmul.f32 0.5, %v509
      %v511 = vsub.f32 1.5, %v510
      %v512 = vmul.f32 %v507, %v511
      %vm513 = vweird.f32 %v437
      %vm514 = vweird.f32 %v507
      %vm515 = vmor %vm513, %vm514
      %v516 = vsel %vm515, %v507, %v512
      %v517 = vrsqrt.pop %v438
      %v518 = vmul.f32 %v517, %v438
      %v519 = vmul.f32 %v518, %v517
      %v520 = vmul.f32 0.5, %v519
      %v521 = vsub.f32 1.5, %v520
      %v522 = vmul.f32 %v517, %v521
      %vm523 = vweird.f32 %v438
      %vm524 = vweird.f32 %v517
      %vm525 = vmor %vm523, %vm524
      %v526 = vsel %vm525, %v517, %v522
      %v527 = vrsqrt.pop %v439
      %v528 = vmul.f32 %v527, %v439
      %v529 = vmul.f32 %v528, %v527
      %v530 = vmul.f32 0.5, %v529
      %v531 = vsub.f32 1.5, %v530
      %v532 = vmul.f32 %v527, %v531
      %vm533 = vweird.f32 %v439
      %vm534 = vweird.f32 %v527
      %vm535 = vmor %vm533, %vm534
      %v536 = vsel %vm535, %v527, %v532
      %v537 = vrsqrt.pop %v440
      %v538 = vmul.f32 %v537, %v440
      %v539 = vmul.f32 %v538, %v537
      %v540 = vmul.f32 0.5, %v539
      %v541 = vsub.f32 1.5, %v540
      %v542 = vmul.f32 %v537, %v541
      %vm543 = vweird.f32 %v440
      %vm544 = vweird.f32 %v537
      %vm545 = vmor %vm543, %vm544
      %v546 = vsel %vm545, %v537, %v542
      %v547 = vrsqrt.pop %v441
      %v548 = vmul.f32 %v547, %v441
      %v549 = vmul.f32 %v548, %v547
      %v550 = vmul.f32 0.5, %v549
      %v551 = vsub.f32 1.5, %v550
      %v552 = vmul.f32 %v547, %v551
      %vm553 = vweird.f32 %v441
      %vm554 = vweird.f32 %v547
      %vm555 = vmor %vm553, %vm554
      %v556 = vsel %vm555, %v547, %v552
      %v557 = vrsqrt.pop %v442
      %v558 = vmul.f32 %v557, %v442
      %v559 = vmul.f32 %v558, %v557
      %v560 = vmul.f32 0.5, %v559
      %v561 = vsub.f32 1.5, %v560
      %v562 = vmul.f32 %v557, %v561
      %vm563 = vweird.f32 %v442
      %vm564 = vweird.f32 %v557
      %vm565 = vmor %vm563, %vm564
      %v566 = vsel %vm565, %v557, %v562
      %v567 = vrsqrt.pop %v443
      %v568 = vmul.f32 %v567, %v443
      %v569 = vmul.f32 %v568, %v567
      %v570 = vmul.f32 0.5, %v569
      %v571 = vsub.f32 1.5, %v570
      %v572 = vmul.f32 %v567, %v571
      %vm573 = vweird.f32 %v443
      %vm574 = vweird.f32 %v567
      %vm575 = vmor %vm573, %vm574
      %v576 = vsel %vm575, %v567, %v572
      %v577 = vrsqrt.pop %v444
      %v578 = vmul.f32 %v577, %v444
      %v579 = vmul.f32 %v578, %v577
      %v580 = vmul.f32 0.5, %v579
      %v581 = vsub.f32 1.5, %v580
      %v582 = vmul.f32 %v577, %v581
      %vm583 = vweird.f32 %v444
      %vm584 = vweird.f32 %v577
      %vm585 = vmor %vm583, %vm584
      %v586 = vsel %vm585, %v577, %v582
      %v587 = vrsqrt.pop %v445
      %v588 = vmul.f32 %v587, %v445
      %v589 = vmul.f32 %v588, %v587
      %v590 = vmul.f32 0.5, %v589
      %v591 = vsub.f32 1.5, %v590
      %v592 = vmul.f32 %v587, %v591
      %vm593 = vweird.f32 %v445
      %vm594 = vweird.f32 %v587
      %vm595 = vmor %vm593, %vm594
      %v596 = vsel %vm595, %v587, %v592
      %v597 = vrsqrt.pop %v446
      %v598 = vmul.f32 %v597, %v446
      %v599 = vmul.f32 %v598, %v597
      %v600 = vmul.f32 0.5, %v599
      %v601 = vsub.f32 1.5, %v600
      %v602 = vmul.f32 %v597, %v601
      %vm603 = vweird.f32 %v446
      %vm604 = vweird.f32 %v597
      %vm605 = vmor %vm603, %vm604
      %v606 = vsel %vm605, %v597, %v602
      %v607 = vmul.f32 %v351, %v456
      %v608 = vmul.f32 %v352, %v466
      %v609 = vmul.f32 %v353, %v476
      %v610 = vmul.f32 %v354, %v486
      %v611 = vmul.f32 %v355, %v496
      %v612 = vmul.f32 %v356, %v506
      %v613 = vmul.f32 %v357, %v516
      %v614 = vmul.f32 %v358, %v526
      %v615 = vmul.f32 %v359, %v536
      %v616 = vmul.f32 %v360, %v546
      %v617 = vmul.f32 %v361, %v556
      %v618 = vmul.f32 %v362, %v566
      %v619 = vmul.f32 %v363, %v576
      %v620 = vmul.f32 %v364, %v586
      %v621 = vmul.f32 %v365, %v596
      %v622 = vmul.f32 %v366, %v606
      %v623 = vld [vmem:[%s1] sm:$0x1]
      %v625 = vperm.slane %v623, 0
      %v627 = vmul.f32 %v607, %v625
      %v628 = vmul.f32 %v608, %v625
      %v629 = vmul.f32 %v609, %v625
      %v630 = vmul.f32 %v610, %v625
      %v631 = vmul.f32 %v611, %v625
      %v632 = vmul.f32 %v612, %v625
      %v633 = vmul.f32 %v613, %v625
      %v634 = vmul.f32 %v614, %v625
      %v635 = vmul.f32 %v615, %v625
      %v636 = vmul.f32 %v616, %v625
      %v637 = vmul.f32 %v617, %v625
      %v638 = vmul.f32 %v618, %v625
      %v639 = vmul.f32 %v619, %v625
      %v640 = vmul.f32 %v620, %v625
      %v641 = vmul.f32 %v621, %v625
      %v642 = vmul.f32 %v622, %v625
      %v643 = vld [vmem:[%s2] sm:$0x1]
      %v645 = vperm.slane %v643, 0
      %v647 = vadd.f32 %v627, %v645
      %v648 = vadd.f32 %v628, %v645
      %v649 = vadd.f32 %v629, %v645
      %v650 = vadd.f32 %v630, %v645
      %v651 = vadd.f32 %v631, %v645
      %v652 = vadd.f32 %v632, %v645
      %v653 = vadd.f32 %v633, %v645
      %v654 = vadd.f32 %v634, %v645
      %v655 = vadd.f32 %v635, %v645
      %v656 = vadd.f32 %v636, %v645
      %v657 = vadd.f32 %v637, %v645
      %v658 = vadd.f32 %v638, %v645
      %v659 = vadd.f32 %v639, %v645
      %v660 = vadd.f32 %v640, %v645
      %v661 = vadd.f32 %v641, %v645
      %v662 = vadd.f32 %v642, %v645
      %v663 = vpack.c.bf16 %v648, %v647
      %v664 = vpack.c.bf16 %v650, %v649
      %v665 = vpack.c.bf16 %v652, %v651
      %v666 = vpack.c.bf16 %v654, %v653
      %v667 = vpack.c.bf16 %v656, %v655
      %v668 = vpack.c.bf16 %v658, %v657
      %v669 = vpack.c.bf16 %v660, %v659
      %v670 = vpack.c.bf16 %v662, %v661
      %v671 = vld [vmem:[%s3] sm:$0xf]
      %v672 = vld [vmem:[%s3 + $0x4] sm:$0xf]
      %v673 = vld [vmem:[%s3 + $0x8] sm:$0xf]
      %v674 = vld [vmem:[%s3 + $0xc] sm:$0xf]
      %v675 = vld [vmem:[%s3 + $0x10] sm:$0xf]
      %v676 = vld [vmem:[%s3 + $0x14] sm:$0xf]
      %v677 = vld [vmem:[%s3 + $0x18] sm:$0xf]
      %v678 = vld [vmem:[%s3 + $0x1c] sm:$0xf]
      %v679 = vld [vmem:[%s3 + $0x20] sm:$0xf]
      %v680 = vld [vmem:[%s3 + $0x24] sm:$0xf]
      %v681 = vld [vmem:[%s3 + $0x28] sm:$0xf]
      %v682 = vld [vmem:[%s3 + $0x2c] sm:$0xf]
      %v683 = vld [vmem:[%s3 + $0x30] sm:$0xf]
      %v684 = vld [vmem:[%s3 + $0x34] sm:$0xf]
      %v685 = vld [vmem:[%s3 + $0x38] sm:$0xf]
      %v686 = vld [vmem:[%s3 + $0x3c] sm:$0xf]
      %v687 = vld [vmem:[%s4] sm:$0x1]
      %v689 = vperm.slane %v687, 0
      %v707 = vunpack.c.l.b16 %v671
      %v708 = vunpack.c.l.b16 %v672
      %v709 = vunpack.c.l.b16 %v673
      %v710 = vunpack.c.l.b16 %v674
      %v711 = vunpack.c.l.b16 %v675
      %v712 = vunpack.c.l.b16 %v676
      %v713 = vunpack.c.l.b16 %v677
      %v714 = vunpack.c.l.b16 %v678
      %v715 = vunpack.c.l.b16 %v679
      %v716 = vunpack.c.l.b16 %v680
      %v717 = vunpack.c.l.b16 %v681
      %v718 = vunpack.c.l.b16 %v682
      %v719 = vunpack.c.l.b16 %v683
      %v720 = vunpack.c.l.b16 %v684
      %v721 = vunpack.c.l.b16 %v685
      %v722 = vunpack.c.l.b16 %v686
      %v723 = vpack.c.b16 %v708, %v707
      %v724 = vpack.c.b16 %v710, %v709
      %v725 = vpack.c.b16 %v712, %v711
      %v726 = vpack.c.b16 %v714, %v713
      %v727 = vpack.c.b16 %v716, %v715
      %v728 = vpack.c.b16 %v718, %v717
      %v729 = vpack.c.b16 %v720, %v719
      %v730 = vpack.c.b16 %v722, %v721
      %739 = vmatpush.bf16.msra.mxu0 %v730
      %740 = vmatpush.bf16.msra.mxu0 %v729
      %741 = vmatpush.bf16.msra.mxu0 %v728
      %742 = vmatpush.bf16.msra.mxu0 %v727
      %743 = vmatpush.bf16.msra.mxu0 %v726
      %744 = vmatpush.bf16.msra.mxu0 %v725
      %745 = vmatpush.bf16.msra.mxu0 %v724
      %746 = vmatpush.bf16.msra.mxu0 %v723
      %747 = vmatmul.bf16.gmra.mxu0 %v663
      %v748 = vpop.f32.mrf.mxu0
      %v749 = vadd.f32 %v689, %v748
      %v750 = vpop.f32.mrf.mxu0
      %v751 = vadd.f32 %v689, %v750
      %752 = vmatmul.bf16.gmra.mxu0 %v664
      %v753 = vpop.f32.mrf.mxu0
      %v754 = vadd.f32 %v689, %v753
      %v755 = vpop.f32.mrf.mxu0
      %v756 = vadd.f32 %v689, %v755
      %757 = vmatmul.bf16.gmra.mxu0 %v665
      %v758 = vpop.f32.mrf.mxu0
      %v759 = vadd.f32 %v689, %v758
      %v760 = vpop.f32.mrf.mxu0
      %v761 = vadd.f32 %v689, %v760
      %762 = vmatmul.bf16.gmra.mxu0 %v666
      %v763 = vpop.f32.mrf.mxu0
      %v764 = vadd.f32 %v689, %v763
      %v765 = vpop.f32.mrf.mxu0
      %v766 = vadd.f32 %v689, %v765
      %767 = vmatmul.bf16.gmra.mxu0 %v667
      %v768 = vpop.f32.mrf.mxu0
      %v769 = vadd.f32 %v689, %v768
      %v770 = vpop.f32.mrf.mxu0
      %v771 = vadd.f32 %v689, %v770
      %772 = vmatmul.bf16.gmra.mxu0 %v668
      %v773 = vpop.f32.mrf.mxu0
      %v774 = vadd.f32 %v689, %v773
      %v775 = vpop.f32.mrf.mxu0
      %v776 = vadd.f32 %v689, %v775
      %777 = vmatmul.bf16.gmra.mxu0 %v669
      %v778 = vpop.f32.mrf.mxu0
      %v779 = vadd.f32 %v689, %v778
      %v780 = vpop.f32.mrf.mxu0
      %v781 = vadd.f32 %v689, %v780
      %782 = vmatmul.bf16.gmra.mxu0 %v670
      %v783 = vpop.f32.mrf.mxu0
      %v784 = vadd.f32 %v689, %v783
      %v785 = vpop.f32.mrf.mxu0
      %v786 = vadd.f32 %v689, %v785
      %787 = vdwg.mxu0
      %788 = vst [vmem:[%s260] sm:$0xff] %v749
      %789 = vst [vmem:[%s260 + $0x8] sm:$0xff] %v751
      %790 = vst [vmem:[%s260 + $0x10] sm:$0xff] %v754
      %791 = vst [vmem:[%s260 + $0x18] sm:$0xff] %v756
      %792 = vst [vmem:[%s260 + $0x20] sm:$0xff] %v759
      %793 = vst [vmem:[%s260 + $0x28] sm:$0xff] %v761
      %794 = vst [vmem:[%s260 + $0x30] sm:$0xff] %v764
      %795 = vst [vmem:[%s260 + $0x38] sm:$0xff] %v766
      %796 = vst [vmem:[%s260 + $0x40] sm:$0xff] %v769
      %797 = vst [vmem:[%s260 + $0x48] sm:$0xff] %v771
      %798 = vst [vmem:[%s260 + $0x50] sm:$0xff] %v774
      %799 = vst [vmem:[%s260 + $0x58] sm:$0xff] %v776
      %800 = vst [vmem:[%s260 + $0x60] sm:$0xff] %v779
      %801 = vst [vmem:[%s260 + $0x68] sm:$0xff] %v781
      %802 = vst [vmem:[%s260 + $0x70] sm:$0xff] %v784
      %803 = vst [vmem:[%s260 + $0x78] sm:$0xff] %v786
      %s804 = smul.u32 %s18, 128
      %v805 = vlaneseq
      %v806 = vshrl.u32 %v805, 7
      %v807 = vadd.s32 %v806, 8
      %v808 = vadd.s32 %v806, 16
      %v809 = vadd.s32 %v806, 24
      %v810 = vadd.s32 %v806, 32
      %v811 = vadd.s32 %v806, 40
      %v812 = vadd.s32 %v806, 48
      %v813 = vadd.s32 %v806, 56
      %v814 = vadd.s32 %v806, 64
      %v815 = vadd.s32 %v806, 72
      %v816 = vadd.s32 %v806, 80
      %v817 = vadd.s32 %v806, 88
      %v818 = vadd.s32 %v806, 96
      %v819 = vadd.s32 %v806, 104
      %v820 = vadd.s32 %v806, 112
      %v821 = vadd.s32 %v806, 120
      %v822 = vstv %s804
      %v823 = vadd.s32 %v806, %v822
      %v824 = vadd.s32 %v807, %v822
      %v825 = vadd.s32 %v808, %v822
      %v826 = vadd.s32 %v809, %v822
      %v827 = vadd.s32 %v810, %v822
      %v828 = vadd.s32 %v811, %v822
      %v829 = vadd.s32 %v812, %v822
      %v830 = vadd.s32 %v813, %v822
      %v831 = vadd.s32 %v814, %v822
      %v832 = vadd.s32 %v815, %v822
      %v833 = vadd.s32 %v816, %v822
      %v834 = vadd.s32 %v817, %v822
      %v835 = vadd.s32 %v818, %v822
      %v836 = vadd.s32 %v819, %v822
      %v837 = vadd.s32 %v820, %v822
      %v838 = vadd.s32 %v821, %v822
      %vm839 = vcmp.lt.s32.totalorder %v823, 200
      %vm840 = vcmp.lt.s32.totalorder %v824, 200
      %vm841 = vcmp.lt.s32.totalorder %v825, 200
      %vm842 = vcmp.lt.s32.totalorder %v826, 200
      %vm843 = vcmp.lt.s32.totalorder %v827, 200
      %vm844 = vcmp.lt.s32.totalorder %v828, 200
      %vm845 = vcmp.lt.s32.totalorder %v829, 200
      %vm846 = vcmp.lt.s32.totalorder %v830, 200
      %vm847 = vcmp.lt.s32.totalorder %v831, 200
      %vm848 = vcmp.lt.s32.totalorder %v832, 200
      %vm849 = vcmp.lt.s32.totalorder %v833, 200
      %vm850 = vcmp.lt.s32.totalorder %v834, 200
      %vm851 = vcmp.lt.s32.totalorder %v835, 200
      %vm852 = vcmp.lt.s32.totalorder %v836, 200
      %vm853 = vcmp.lt.s32.totalorder %v837, 200
      %vm854 = vcmp.lt.s32.totalorder %v838, 200
      %v855 = vsel %vm839, 1, 0
      %v856 = vsel %vm840, 1, 0
      %v857 = vsel %vm841, 1, 0
      %v858 = vsel %vm842, 1, 0
      %v859 = vsel %vm843, 1, 0
      %v860 = vsel %vm844, 1, 0
      %v861 = vsel %vm845, 1, 0
      %v862 = vsel %vm846, 1, 0
      %v863 = vsel %vm847, 1, 0
      %v864 = vsel %vm848, 1, 0
      %v865 = vsel %vm849, 1, 0
      %v866 = vsel %vm850, 1, 0
      %v867 = vsel %vm851, 1, 0
      %v868 = vsel %vm852, 1, 0
      %v869 = vsel %vm853, 1, 0
      %v870 = vsel %vm854, 1, 0
      %vm871 = vcmp.eq.s32.totalorder %v855, 1
      %vm872 = vcmp.eq.s32.totalorder %v856, 1
      %vm873 = vcmp.eq.s32.totalorder %v857, 1
      %vm874 = vcmp.eq.s32.totalorder %v858, 1
      %vm875 = vcmp.eq.s32.totalorder %v859, 1
      %vm876 = vcmp.eq.s32.totalorder %v860, 1
      %vm877 = vcmp.eq.s32.totalorder %v861, 1
      %vm878 = vcmp.eq.s32.totalorder %v862, 1
      %vm879 = vcmp.eq.s32.totalorder %v863, 1
      %vm880 = vcmp.eq.s32.totalorder %v864, 1
      %vm881 = vcmp.eq.s32.totalorder %v865, 1
      %vm882 = vcmp.eq.s32.totalorder %v866, 1
      %vm883 = vcmp.eq.s32.totalorder %v867, 1
      %vm884 = vcmp.eq.s32.totalorder %v868, 1
      %vm885 = vcmp.eq.s32.totalorder %v869, 1
      %vm886 = vcmp.eq.s32.totalorder %v870, 1
      %v887 = vsel %vm871, %v749, 0.0
      %v888 = vsel %vm872, %v751, 0.0
      %v889 = vsel %vm873, %v754, 0.0
      %v890 = vsel %vm874, %v756, 0.0
      %v891 = vsel %vm875, %v759, 0.0
      %v892 = vsel %vm876, %v761, 0.0
      %v893 = vsel %vm877, %v764, 0.0
      %v894 = vsel %vm878, %v766, 0.0
      %v895 = vsel %vm879, %v769, 0.0
      %v896 = vsel %vm880, %v771, 0.0
      %v897 = vsel %vm881, %v774, 0.0
      %v898 = vsel %vm882, %v776, 0.0
      %v899 = vsel %vm883, %v779, 0.0
      %v900 = vsel %vm884, %v781, 0.0
      %v901 = vsel %vm885, %v784, 0.0
      %v902 = vsel %vm886, %v786, 0.0
      %v903 = vadd.f32 %v887, %v888
      %v904 = vadd.f32 %v903, %v889
      %v905 = vadd.f32 %v904, %v890
      %v906 = vadd.f32 %v905, %v891
      %v907 = vadd.f32 %v906, %v892
      %v908 = vadd.f32 %v907, %v893
      %v909 = vadd.f32 %v908, %v894
      %v910 = vadd.f32 %v909, %v895
      %v911 = vadd.f32 %v910, %v896
      %v912 = vadd.f32 %v911, %v897
      %v913 = vadd.f32 %v912, %v898
      %v914 = vadd.f32 %v913, %v899
      %v915 = vadd.f32 %v914, %v900
      %v916 = vadd.f32 %v915, %v901
      %v917 = vadd.f32 %v916, %v902
      %v918 = vrot.slane %v917, 4
      %v919 = vadd.f32 %v917, %v918
      %v920 = vrot.slane %v919, 2
      %v921 = vadd.f32 %v919, %v920
      %v922 = vrot.slane %v921, 1
      %v923 = vadd.f32 %v921, %v922
      %v924 = vmul.f32 %v887, %v887
      %v925 = vmul.f32 %v888, %v888
      %v926 = vmul.f32 %v889, %v889
      %v927 = vmul.f32 %v890, %v890
      %v928 = vmul.f32 %v891, %v891
      %v929 = vmul.f32 %v892, %v892
      %v930 = vmul.f32 %v893, %v893
      %v931 = vmul.f32 %v894, %v894
      %v932 = vmul.f32 %v895, %v895
      %v933 = vmul.f32 %v896, %v896
      %v934 = vmul.f32 %v897, %v897
      %v935 = vmul.f32 %v898, %v898
      %v936 = vmul.f32 %v899, %v899
      %v937 = vmul.f32 %v900, %v900
      %v938 = vmul.f32 %v901, %v901
      %v939 = vmul.f32 %v902, %v902
      %v940 = vadd.f32 %v924, %v925
      %v941 = vadd.f32 %v940, %v926
      %v942 = vadd.f32 %v941, %v927
      %v943 = vadd.f32 %v942, %v928
      %v944 = vadd.f32 %v943, %v929
      %v945 = vadd.f32 %v944, %v930
      %v946 = vadd.f32 %v945, %v931
      %v947 = vadd.f32 %v946, %v932
      %v948 = vadd.f32 %v947, %v933
      %v949 = vadd.f32 %v948, %v934
      %v950 = vadd.f32 %v949, %v935
      %v951 = vadd.f32 %v950, %v936
      %v952 = vadd.f32 %v951, %v937
      %v953 = vadd.f32 %v952, %v938
      %v954 = vadd.f32 %v953, %v939
      %v955 = vrot.slane %v954, 4
      %v956 = vadd.f32 %v954, %v955
      %v957 = vrot.slane %v956, 2
      %v958 = vadd.f32 %v956, %v957
      %v959 = vrot.slane %v958, 1
      %v960 = vadd.f32 %v958, %v959
      %vm961 = vcmask 1040384
      %v962 = vsel %vm961, %v923, %v960
      %963 = vst [vmem:[%s265] sm:$0x3] %v962
      %s964 = smul.u32 16, %s18
      %p965 = scmp.lt.s32.totalorder %s964, 31
      %s966 = scalar_select %p965, %s964, 31
      %s967 = smul.addr %s966, 8
      %s968 = scalar_lea.vmem %s5, %s967
      %p969 = scmp.lt.s32.totalorder %s18, 1
      %s970 = scalar_select %p969, %s18, 1
      %s971 = smul.addr %s970, 2
      %s972 = scalar_lea.vmem %s6, %s971
      // Predicated region
      $region41: #{projection_head.2} parent=39 // pred_check
        %p973 = pneg %p146
      $region42: #{projection_head.2} parent=39 // pred_check_branch
        %975 = sbr.rel (%p973) target = $region44
      $region43: #{projection_head.2} parent=39 // pred_region
        %s976 = smul.u32 16, %s18
      $region44: #{projection_head.2} parent=39 // pred_fallthru
        _
      // Predicated region
      $region45: #{projection_head.2} parent=39 // pred_check
        %p977 = pneg %p172
      $region46: #{projection_head.2} parent=39 // pred_check_branch
        %979 = sbr.rel (%p977) target = $region48
      $region47: #{projection_head.2} parent=39 // pred_region
        _
      $region48: #{projection_head.2} parent=39 // pred_fallthru
        _
    $region40: #{projection_head.2} parent=5 // pred_fallthru
      _
    %p980 = scmp.le.s32.totalorder 2, %s13
    // Predicated region
    $region49: #{projection_head.2} parent=5 // pred_check
      %p981 = pneg %p980
    $region50: #{projection_head.2} parent=5 // pred_check_branch
      %983 = sbr.rel (%p981) target = $region52
    $region51: #{projection_head.2} parent=5 // pred_region
      %s984 = ssub.s32 %s13, 2
      // Predicated region
      $region53: #{projection_head.2} parent=51 // pred_check
        %p985 = pneg %p152
      $region54: #{projection_head.2} parent=51 // pred_check_branch
        %987 = sbr.rel (%p985) target = $region56
      $region55: #{projection_head.2} parent=51 // pred_region
        %s988 = smul.u32 16, %s19
        %p989 = scmp.lt.s32.totalorder %s988, 31
        %s990 = scalar_select %p989, %s988, 31
        %s991 = smul.addr %s990, 8
        %s992 = scalar_lea.vmem %s5, %s991
      $region56: #{projection_head.2} parent=51 // pred_fallthru
        _
      // Predicated region
      $region57: #{projection_head.2} parent=51 // pred_check
        %p993 = pneg %p178
      $region58: #{projection_head.2} parent=51 // pred_check_branch
        %995 = sbr.rel (%p993) target = $region60
      $region59: #{projection_head.2} parent=51 // pred_region
        %p996 = scmp.lt.s32.totalorder %s19, 1
        %s997 = scalar_select %p996, %s19, 1
        %s998 = smul.addr %s997, 2
        %s999 = scalar_lea.vmem %s6, %s998
      $region60: #{projection_head.2} parent=51 // pred_fallthru
        _
    $region52: #{projection_head.2} parent=5 // pred_fallthru
      _
  $region6: #{projection_head.2} parent=0 // loop_footer
    %s17 = sadd.s32 1, %s13
  $region7: #{projection_head.2} parent=0 // loop_footer_branch
    %12 = sbr.rel target = $region3
  $region8: #{projection_head.2} parent=0 // loop_exit
    _

</llo_original>
